<compile_context>
chip_gen: v7x
topology: tpu7x:2x2x1
jax: 0.10.0
libtpu: 0.0.40
codegen_flags: <defaults>
</compile_context>

<pallas_src>
import functools
import math

import jax
import jax.numpy as jnp
from jax.experimental import pallas as pl
from jax.experimental.pallas import tpu as pltpu

LN_EPS = 1e-5
NEG_INF = -1e9


# --------------------- fused all-layers decoder kernel ----------------------

def _gpt_layers_kernel(x_ref, pad_ref,
                       wqkv_ref, bqkv_ref, wo_ref, bo_ref,
                       ln1g_ref, ln1b_ref, w1_ref, b1_ref, w2_ref, b2_ref,
                       ln2g_ref, ln2b_ref,
                       o_ref, x_sc, *,
                       batch, seq, num_heads, d_k, d_v):
    l = pl.program_id(0)

    # Layer 0: seed the VMEM-resident activation carry from the HBM input.
    @pl.when(l == 0)
    def _():
        x_sc[...] = x_ref[...]

    x2 = x_sc[...]                                            # [B*S, D] f32

    # Fused QKV projection: one MXU pass, bf16 operands, fp32 accumulation.
    # (1/sqrt(d_k) is already folded into the Q columns of wqkv at init.)
    qkv = jnp.dot(x2.astype(jnp.bfloat16), wqkv_ref[...],
                  preferred_element_type=jnp.float32) + bqkv_ref[...]

    # Additive causal + key-pad bias, built in-kernel from a [B, S] pad vector
    # (no [B,S,S] HBM stream per layer).
    row = jax.lax.broadcasted_iota(jnp.int32, (batch, seq, seq), 1)
    col = jax.lax.broadcasted_iota(jnp.int32, (batch, seq, seq), 2)
    causal = jnp.where(col > row, NEG_INF, 0.0).astype(jnp.float32)
    bias = causal + pad_ref[...][:, None, :]                  # [B, S, S]

    q_off = 0
    k_off = num_heads * d_k
    v_off = 2 * num_heads * d_k

    # Per-head attention, batched over B with rank-3 contractions.
    # TODO(synk): for long sequences switch to a KV-tiled online-softmax
    # (flash) formulation instead of materializing the full [B,S,S] scores.
    head_outs = []
    for h in range(num_heads):
        q = qkv[:, q_off + h * d_k:q_off + (h + 1) * d_k].reshape(batch, seq, d_k)
        k = qkv[:, k_off + h * d_k:k_off + (h + 1) * d_k].reshape(batch, seq, d_k)
        v = qkv[:, v_off + h * d_v:v_off + (h + 1) * d_v].reshape(batch, seq, d_v)
        s = jnp.einsum('bqd,bkd->bqk', q.astype(jnp.bfloat16),
                       k.astype(jnp.bfloat16),
                       preferred_element_type=jnp.float32)    # [B, S, S]
        s = s + bias
        m = jnp.max(s, axis=-1, keepdims=True)
        p = jnp.exp(s - m)
        inv = pl.reciprocal(jnp.sum(p, axis=-1, keepdims=True), approx=True)
        p = p * inv
        head_outs.append(jnp.einsum('bqk,bkd->bqd', p.astype(jnp.bfloat16),
                                    v.astype(jnp.bfloat16),
                                    preferred_element_type=jnp.float32))
    ctx = jnp.concatenate(head_outs, axis=-1)                 # [B, S, H*d_v]
    ctx = ctx.reshape(batch * seq, num_heads * d_v)

    # Output projection + residual + post-LayerNorm (fp32 statistics).
    proj = jnp.dot(ctx.astype(jnp.bfloat16), wo_ref[...],
                   preferred_element_type=jnp.float32) + bo_ref[...]
    h1 = x2 + proj
    mu = jnp.mean(h1, axis=-1, keepdims=True)
    var = jnp.mean((h1 - mu) ** 2, axis=-1, keepdims=True)
    h1 = (h1 - mu) * jax.lax.rsqrt(var + LN_EPS) * ln1g_ref[...] + ln1b_ref[...]

    # FFN + residual + post-LayerNorm.
    f = jnp.dot(h1.astype(jnp.bfloat16), w1_ref[...],
                preferred_element_type=jnp.float32) + b1_ref[...]
    f = jnp.maximum(f, 0.0)
    f = jnp.dot(f.astype(jnp.bfloat16), w2_ref[...],
                preferred_element_type=jnp.float32) + b2_ref[...]
    h2 = h1 + f
    mu = jnp.mean(h2, axis=-1, keepdims=True)
    var = jnp.mean((h2 - mu) ** 2, axis=-1, keepdims=True)
    out = (h2 - mu) * jax.lax.rsqrt(var + LN_EPS) * ln2g_ref[...] + ln2b_ref[...]

    # Carry to the next layer (VMEM scratch) and into the resident output
    # block (constant block index -> single HBM writeback at grid end).
    x_sc[...] = out
    o_ref[...] = out


def fused_decoder_stack(x2d, pad_bias, params, *, batch, seq,
                        num_heads, d_k, d_v):
    M, D = x2d.shape
    L, _, n_qkv = params["wqkv"].shape
    HV = num_heads * d_v
    F = params["w1"].shape[2]
    B, S = pad_bias.shape

    kernel = functools.partial(_gpt_layers_kernel, batch=batch, seq=seq,
                               num_heads=num_heads, d_k=d_k, d_v=d_v)

    def const_spec(shape):
        # layer-invariant input / output: constant block index, stays resident
        return pl.BlockSpec(shape, lambda l, _s=shape: (0,) * len(_s))

    def per_layer(shape):
        # stacked [L, ...] weight: leading layer dim squeezed, indexed by l
        return pl.BlockSpec((None,) + shape,
                            lambda l, _s=shape: (l,) + (0,) * len(_s))

    return pl.pallas_call(
        kernel,
        out_shape=jax.ShapeDtypeStruct((M, D), jnp.float32),
        grid=(L,),
        in_specs=[const_spec((M, D)),
                  const_spec((B, S)),
                  per_layer((D, n_qkv)), per_layer((1, n_qkv)),
                  per_layer((HV, D)), per_layer((1, D)),
                  per_layer((1, D)), per_layer((1, D)),
                  per_layer((D, F)), per_layer((1, F)),
                  per_layer((F, D)), per_layer((1, D)),
                  per_layer((1, D)), per_layer((1, D))],
        out_specs=const_spec((M, D)),
        scratch_shapes=[pltpu.VMEM((M, D), jnp.float32)],
        compiler_params=pltpu.CompilerParams(
            dimension_semantics=("arbitrary",)),   # layers are sequential
    )(x2d, pad_bias,
      params["wqkv"], params["bqkv"], params["wo"], params["bo"],
      params["ln1_g"], params["ln1_b"], params["w1"], params["b1"],
      params["w2"], params["b2"], params["ln2_g"], params["ln2_b"])


# ----------------------------- output projection ----------------------------

def _logits_kernel(x_ref, w_ref, b_ref, o_ref):
    o_ref[...] = (jnp.dot(x_ref[...].astype(jnp.bfloat16), w_ref[...],
                          preferred_element_type=jnp.float32) + b_ref[...])


def logits_linear(x2d, w, b, *, v_tile=2048):
    M, D = x2d.shape
    V = w.shape[1]
    tv = V if V <= v_tile else v_tile        # whole vocab at toy size
    assert V % tv == 0
    # TODO(synk): at real vocab (~50k) also tile M and emit bf16 logits / fuse
    # the softmax+loss to cut the fp32 [M, V] writeback.
    return pl.pallas_call(
        _logits_kernel,
        out_shape=jax.ShapeDtypeStruct((M, V), jnp.float32),
        grid=(V // tv,),
        in_specs=[pl.BlockSpec((M, D), lambda j: (0, 0)),
                  pl.BlockSpec((D, tv), lambda j: (0, j)),
                  pl.BlockSpec((1, tv), lambda j: (0, j))],
        out_specs=pl.BlockSpec((M, tv), lambda j: (0, j)),
        compiler_params=pltpu.CompilerParams(
            dimension_semantics=("parallel",)),
    )(x2d, w, b)


# ------------------------------ model (glue) --------------------------------

def init_params(key, layers, num_heads, d_model, d_v, d_k, d_ff,
                window_size, vocab_size, pad_idx):
    def nrm(k, shape, scale=0.02):
        return (scale * jax.random.normal(k, shape)).astype(jnp.float32)

    keys = iter(jax.random.split(key, 3 + layers * 4))

    tok_emb = nrm(next(keys), (vocab_size, d_model))
    tok_emb = tok_emb.at[pad_idx].set(0.0)          # padding_idx row is zero
    pos_emb = nrm(next(keys), (window_size, d_model))

    n_qkv = num_heads * (2 * d_k + d_v)
    q_cols = num_heads * d_k
    attn_scale = 1.0 / math.sqrt(d_k)

    wqkv, bqkv, wo, bo = [], [], [], []
    ln1g, ln1b, w1, b1, w2, b2, ln2g, ln2b = [], [], [], [], [], [], [], []
    for _ in range(layers):
        wq = nrm(next(keys), (d_model, n_qkv))
        # Fold the 1/sqrt(d_k) attention scale into the Q columns (bias is
        # zero here; a nonzero Q bias would need the same scaling).
        wq = wq.at[:, :q_cols].multiply(attn_scale)
        wqkv.append(wq.astype(jnp.bfloat16))
        bqkv.append(jnp.zeros((1, n_qkv), jnp.float32))
        wo.append(nrm(next(keys), (num_heads * d_v, d_model)).astype(jnp.bfloat16))
        bo.append(jnp.zeros((1, d_model), jnp.float32))
        ln1g.append(jnp.ones((1, d_model), jnp.float32))
        ln1b.append(jnp.zeros((1, d_model), jnp.float32))
        w1.append(nrm(next(keys), (d_model, d_ff)).astype(jnp.bfloat16))
        b1.append(jnp.zeros((1, d_ff), jnp.float32))
        w2.append(nrm(next(keys), (d_ff, d_model)).astype(jnp.bfloat16))
        b2.append(jnp.zeros((1, d_model), jnp.float32))
        ln2g.append(jnp.ones((1, d_model), jnp.float32))
        ln2b.append(jnp.zeros((1, d_model), jnp.float32))

    stack = lambda xs: jnp.stack(xs, axis=0)
    w_out = nrm(next(keys), (d_model, vocab_size)).astype(jnp.bfloat16)
    b_out = jnp.zeros((1, vocab_size), jnp.float32)

    return dict(tok_emb=tok_emb, pos_emb=pos_emb,
                wqkv=stack(wqkv), bqkv=stack(bqkv),
                wo=stack(wo), bo=stack(bo),
                ln1_g=stack(ln1g), ln1_b=stack(ln1b),
                w1=stack(w1), b1=stack(b1), w2=stack(w2), b2=stack(b2),
                ln2_g=stack(ln2g), ln2_b=stack(ln2b),
                w_out=w_out, b_out=b_out)


def gpt_forward(params, ctx, *, num_heads, d_k, d_v, pad_idx, window_size):
    B, S = ctx.shape
    assert S <= window_size
    D = params["tok_emb"].shape[1]

    # Embedding gather + positional embedding (tiny, data-dependent XLA glue).
    x = jnp.take(params["tok_emb"], ctx, axis=0) + params["pos_emb"][:S]
    # TODO(synk): nn.Dropout omitted — identity in eval mode / dropout=0.0.
    x2 = x.reshape(B * S, D).astype(jnp.float32)

    # Only the [B, S] key-pad vector goes to the kernel; the causal part of
    # the additive mask is rebuilt in-kernel from iota.
    pad_bias = jnp.where(ctx == pad_idx, NEG_INF, 0.0).astype(jnp.float32)

    x2 = fused_decoder_stack(x2, pad_bias, params, batch=B, seq=S,
                             num_heads=num_heads, d_k=d_k, d_v=d_v)

    logits = logits_linear(x2, params["w_out"], params["b_out"])
    return logits.reshape(B, S, -1)


# --------------------------------- main -------------------------------------

if __name__ == "__main__":
    layers = 2
    num_heads = 2
    d_model = 32
    d_k = 16
    d_v = 16
    d_ff = 64
    dropout = 0.0
    window_size = 16
    vocab_size = 64
    pad_idx = 0

    B, S = 2, 8

    key = jax.random.PRNGKey(0)
    pkey, ckey = jax.random.split(key)
    params = init_params(pkey, layers, num_heads, d_model, d_v, d_k, d_ff,
                         window_size, vocab_size, pad_idx)

    ctx = jax.random.randint(ckey, (B, S), 1, vocab_size, dtype=jnp.int32)
    ctx = ctx.at[1, -2:].set(pad_idx)   # trailing padding in second sequence

    fwd = jax.jit(functools.partial(
        gpt_forward, num_heads=num_heads, d_k=d_k, d_v=d_v,
        pad_idx=pad_idx, window_size=window_size))

    logits = fwd(params, ctx)
    jax.block_until_ready(logits)
    assert logits.shape == (B, S, vocab_size)
    assert bool(jnp.all(jnp.isfinite(logits)))
    print("KERNEL_OK")
</pallas_src>

<mosaic_0001>
module attributes {stable_mosaic.version = 11 : i64} {
  func.func @_logits_kernel(%arg0: i32, %arg1: memref<16x32xf32, #tpu.memory_space<vmem>>, %arg2: memref<32x64xbf16, #tpu.memory_space<vmem>>, %arg3: memref<1x64xf32, #tpu.memory_space<vmem>>, %arg4: memref<16x64xf32, #tpu.memory_space<vmem>>) attributes {dimension_semantics = [#tpu.dimension_semantics<parallel>], iteration_bounds = array<i64: 1>, scalar_prefetch = 0 : i64, scratch_operands = 0 : i64, tpu.core_type = #tpu.core_type<tc>, window_params = [{pipeline_mode = #tpu.pipeline_mode<synchronous>, transform_indices = @transform_0, window_bounds = array<i64: 16, 32>}, {transform_indices = @transform_1, window_bounds = array<i64: 32, 64>}, {transform_indices = @transform_2, window_bounds = array<i64: 1, 64>}, {transform_indices = @transform_3, window_bounds = array<i64: 16, 64>}]} {
    %c0 = arith.constant 0 : index
    %c0_0 = arith.constant 0 : index
    %0 = vector.load %arg1[%c0, %c0_0] : memref<16x32xf32, #tpu.memory_space<vmem>>, vector<16x32xf32>
    %1 = arith.truncf %0 : vector<16x32xf32> to vector<16x32xbf16>
    %c0_1 = arith.constant 0 : index
    %c0_2 = arith.constant 0 : index
    %2 = vector.load %arg2[%c0_1, %c0_2] : memref<32x64xbf16, #tpu.memory_space<vmem>>, vector<32x64xbf16>
    %cst = arith.constant dense<0.000000e+00> : vector<16x64xf32>
    %3 = tpu.matmul %1, %2, %cst {dimension_numbers = #tpu.dot_dimension_numbers<[1], [0], [0], [1], [0, 0, 1, 1], [], []>} : vector<16x32xbf16>, vector<32x64xbf16>, vector<16x64xf32> -> vector<16x64xf32>
    %c0_3 = arith.constant 0 : index
    %c0_4 = arith.constant 0 : index
    %4 = vector.load %arg3[%c0_3, %c0_4] : memref<1x64xf32, #tpu.memory_space<vmem>>, vector<1x64xf32>
    %5 = vector.broadcast %4 : vector<1x64xf32> to vector<16x64xf32>
    %6 = arith.addf %3, %5 : vector<16x64xf32>
    %c0_5 = arith.constant 0 : index
    %c0_6 = arith.constant 0 : index
    %7 = vector.load %arg4[%c0_5, %c0_6] : memref<16x64xf32, #tpu.memory_space<vmem>>, vector<16x64xf32>
    tpu.vector_store %arg4[%c0_5, %c0_6], %6 {strides = array<i32>} : memref<16x64xf32, #tpu.memory_space<vmem>>, vector<16x64xf32>,
    return
  }
  func.func @transform_0(%arg0: i32) -> (i32, i32) {
    %c0_i32 = arith.constant 0 : i32
    %c0_i32_0 = arith.constant 0 : i32
    %c0_i32_1 = arith.constant 0 : i32
    return %c0_i32, %c0_i32_0 : i32, i32
  }
  func.func @transform_1(%arg0: i32) -> (i32, i32) {
    %c0_i32 = arith.constant 0 : i32
    %c0_i32_0 = arith.constant 0 : i32
    return %c0_i32, %arg0 : i32, i32
  }
  func.func @transform_2(%arg0: i32) -> (i32, i32) {
    %c0_i32 = arith.constant 0 : i32
    %c0_i32_0 = arith.constant 0 : i32
    return %c0_i32, %arg0 : i32, i32
  }
  func.func @transform_3(%arg0: i32) -> (i32, i32) {
    %c0_i32 = arith.constant 0 : i32
    %c0_i32_0 = arith.constant 0 : i32
    return %c0_i32, %arg0 : i32, i32
  }
}

module attributes {stable_mosaic.version = 11 : i64} {
  func.func @_gpt_layers_kernel(%arg0: i32, %arg1: memref<16x32xf32, #tpu.memory_space<vmem>>, %arg2: memref<2x8xf32, #tpu.memory_space<vmem>>, %arg3: memref<1x32x96xbf16, #tpu.memory_space<vmem>>, %arg4: memref<1x1x96xf32, #tpu.memory_space<vmem>>, %arg5: memref<1x32x32xbf16, #tpu.memory_space<vmem>>, %arg6: memref<1x1x32xf32, #tpu.memory_space<vmem>>, %arg7: memref<1x1x32xf32, #tpu.memory_space<vmem>>, %arg8: memref<1x1x32xf32, #tpu.memory_space<vmem>>, %arg9: memref<1x32x64xbf16, #tpu.memory_space<vmem>>, %arg10: memref<1x1x64xf32, #tpu.memory_space<vmem>>, %arg11: memref<1x64x32xbf16, #tpu.memory_space<vmem>>, %arg12: memref<1x1x32xf32, #tpu.memory_space<vmem>>, %arg13: memref<1x1x32xf32, #tpu.memory_space<vmem>>, %arg14: memref<1x1x32xf32, #tpu.memory_space<vmem>>, %arg15: memref<16x32xf32, #tpu.memory_space<vmem>>, %arg16: memref<16x32xf32, #tpu.memory_space<vmem>>) attributes {dimension_semantics = [#tpu.dimension_semantics<arbitrary>], iteration_bounds = array<i64: 2>, scalar_prefetch = 0 : i64, scratch_operands = 1 : i64, tpu.core_type = #tpu.core_type<tc>, window_params = [{pipeline_mode = #tpu.pipeline_mode<synchronous>, transform_indices = @transform_0, window_bounds = array<i64: 16, 32>}, {pipeline_mode = #tpu.pipeline_mode<synchronous>, transform_indices = @transform_1, window_bounds = array<i64: 2, 8>}, {transform_indices = @transform_2, window_bounds = array<i64: 1, 32, 96>}, {transform_indices = @transform_3, window_bounds = array<i64: 1, 1, 96>}, {transform_indices = @transform_4, window_bounds = array<i64: 1, 32, 32>}, {transform_indices = @transform_5, window_bounds = array<i64: 1, 1, 32>}, {transform_indices = @transform_6, window_bounds = array<i64: 1, 1, 32>}, {transform_indices = @transform_7, window_bounds = array<i64: 1, 1, 32>}, {transform_indices = @transform_8, window_bounds = array<i64: 1, 32, 64>}, {transform_indices = @transform_9, window_bounds = array<i64: 1, 1, 64>}, {transform_indices = @transform_10, window_bounds = array<i64: 1, 64, 32>}, {transform_indices = @transform_11, window_bounds = array<i64: 1, 1, 32>}, {transform_indices = @transform_12, window_bounds = array<i64: 1, 1, 32>}, {transform_indices = @transform_13, window_bounds = array<i64: 1, 1, 32>}, {pipeline_mode = #tpu.pipeline_mode<synchronous>, transform_indices = @transform_14, window_bounds = array<i64: 16, 32>}]} {
    %c0_i32 = arith.constant 0 : i32
    %0 = arith.cmpi eq, %arg0, %c0_i32 : i32
    %1 = arith.extui %0 : i1 to i32
    %c0_i32_0 = arith.constant 0 : i32
    %2 = arith.cmpi ne, %1, %c0_i32_0 : i32
    scf.if %2 {
      %c0_68 = arith.constant 0 : index
      %c0_69 = arith.constant 0 : index
      %152 = vector.load %arg1[%c0_68, %c0_69] : memref<16x32xf32, #tpu.memory_space<vmem>>, vector<16x32xf32>
      %c0_70 = arith.constant 0 : index
      %c0_71 = arith.constant 0 : index
      %153 = vector.load %arg16[%c0_70, %c0_71] : memref<16x32xf32, #tpu.memory_space<vmem>>, vector<16x32xf32>
      tpu.vector_store %arg16[%c0_70, %c0_71], %152 {strides = array<i32>} : memref<16x32xf32, #tpu.memory_space<vmem>>, vector<16x32xf32>,
    } else {
    }
    %c0 = arith.constant 0 : index
    %c0_1 = arith.constant 0 : index
    %3 = vector.load %arg16[%c0, %c0_1] : memref<16x32xf32, #tpu.memory_space<vmem>>, vector<16x32xf32>
    %4 = arith.truncf %3 : vector<16x32xf32> to vector<16x32xbf16>
    %c0_2 = arith.constant 0 : index
    %c0_3 = arith.constant 0 : index
    %c0_4 = arith.constant 0 : index
    %5 = vector.load %arg3[%c0_2, %c0_3, %c0_4] : memref<1x32x96xbf16, #tpu.memory_space<vmem>>, vector<1x32x96xbf16>
    %6 = vector.shape_cast %5 : vector<1x32x96xbf16> to vector<32x96xbf16>
    %cst = arith.constant dense<0.000000e+00> : vector<16x96xf32>
    %7 = tpu.matmul %4, %6, %cst {dimension_numbers = #tpu.dot_dimension_numbers<[1], [0], [0], [1], [0, 0, 1, 1], [], []>} : vector<16x32xbf16>, vector<32x96xbf16>, vector<16x96xf32> -> vector<16x96xf32>
    %c0_5 = arith.constant 0 : index
    %c0_6 = arith.constant 0 : index
    %c0_7 = arith.constant 0 : index
    %8 = vector.load %arg4[%c0_5, %c0_6, %c0_7] : memref<1x1x96xf32, #tpu.memory_space<vmem>>, vector<1x1x96xf32>
    %9 = vector.shape_cast %8 : vector<1x1x96xf32> to vector<1x96xf32>
    %10 = vector.broadcast %9 : vector<1x96xf32> to vector<16x96xf32>
    %11 = arith.addf %7, %10 : vector<16x96xf32>
    %12 = tpu.iota {dimensions = array<i32: 1>} : vector<2x8x8xi32>
    %13 = tpu.iota {dimensions = array<i32: 2>} : vector<2x8x8xi32>
    %14 = arith.cmpi sgt, %13, %12 : vector<2x8x8xi32>
    %cst_8 = arith.constant -1.000000e+09 : f32
    %cst_9 = arith.constant 0.000000e+00 : f32
    %15 = vector.broadcast %cst_8 : f32 to vector<2x8x8xf32>
    %16 = vector.broadcast %cst_9 : f32 to vector<2x8x8xf32>
    %17 = arith.select %14, %15, %16 : vector<2x8x8xi1>, vector<2x8x8xf32>
    %c0_10 = arith.constant 0 : index
    %c0_11 = arith.constant 0 : index
    %18 = vector.load %arg2[%c0_10, %c0_11] : memref<2x8xf32, #tpu.memory_space<vmem>>, vector<2x8xf32>
    %19 = vector.shape_cast %18 : vector<2x8xf32> to vector<2x1x8xf32>
    %20 = vector.broadcast %19 : vector<2x1x8xf32> to vector<2x8x8xf32>
    %21 = arith.addf %17, %20 : vector<2x8x8xf32>
    %22 = vector.extract_strided_slice %11 {offsets = [0, 0], sizes = [16, 16], strides = [1, 1]} : vector<16x96xf32> to vector<16x16xf32>
    %23 = vector.shape_cast %22 : vector<16x16xf32> to vector<2x8x16xf32>
    %24 = vector.extract_strided_slice %11 {offsets = [0, 32], sizes = [16, 16], strides = [1, 1]} : vector<16x96xf32> to vector<16x16xf32>
    %25 = vector.shape_cast %24 : vector<16x16xf32> to vector<2x8x16xf32>
    %26 = vector.extract_strided_slice %11 {offsets = [0, 64], sizes = [16, 16], strides = [1, 1]} : vector<16x96xf32> to vector<16x16xf32>
    %27 = vector.shape_cast %26 : vector<16x16xf32> to vector<2x8x16xf32>
    %28 = arith.truncf %23 : vector<2x8x16xf32> to vector<2x8x16xbf16>
    %29 = arith.truncf %25 : vector<2x8x16xf32> to vector<2x8x16xbf16>
    "tpu.trace_start"() <{level = 10 : i32, message = "bqd,bkd->bqk"}> : () -> ()
    %cst_12 = arith.constant dense<0.000000e+00> : vector<2x8x8xf32>
    %30 = tpu.matmul %28, %29, %cst_12 {dimension_numbers = #tpu.dot_dimension_numbers<[2], [2], [1], [1], [0, 0, 0, 1, 1, 1], [0], [0]>} : vector<2x8x16xbf16>, vector<2x8x16xbf16>, vector<2x8x8xf32> -> vector<2x8x8xf32>
    "tpu.trace_stop"() : () -> ()
    %31 = arith.addf %30, %21 : vector<2x8x8xf32>
    %cst_13 = arith.constant dense<0xFF800000> : vector<2x8xf32>
    %32 = vector.multi_reduction <maximumf>, %31, %cst_13 [2] : vector<2x8x8xf32> to vector<2x8xf32>
    %33 = vector.shape_cast %32 : vector<2x8xf32> to vector<2x8x1xf32>
    %34 = vector.broadcast %33 : vector<2x8x1xf32> to vector<2x8x8xf32>
    %35 = arith.subf %31, %34 : vector<2x8x8xf32>
    %36 = math.exp %35 : vector<2x8x8xf32>
    %cst_14 = arith.constant dense<0.000000e+00> : vector<2x8xf32>
    %37 = vector.multi_reduction <add>, %36, %cst_14 [2] : vector<2x8x8xf32> to vector<2x8xf32>
    %38 = vector.shape_cast %37 : vector<2x8xf32> to vector<2x8x1xf32>
    %39 = tpu.reciprocal %38 {approx = true} : vector<2x8x1xf32> -> vector<2x8x1xf32>
    %40 = vector.broadcast %39 : vector<2x8x1xf32> to vector<2x8x8xf32>
    %41 = arith.mulf %36, %40 : vector<2x8x8xf32>
    %42 = arith.truncf %41 : vector<2x8x8xf32> to vector<2x8x8xbf16>
    %43 = arith.truncf %27 : vector<2x8x16xf32> to vector<2x8x16xbf16>
    "tpu.trace_start"() <{level = 10 : i32, message = "bqk,bkd->bqd"}> : () -> ()
    %cst_15 = arith.constant dense<0.000000e+00> : vector<2x8x16xf32>
    %44 = tpu.matmul %42, %43, %cst_15 {dimension_numbers = #tpu.dot_dimension_numbers<[2], [1], [1], [2], [0, 0, 0, 1, 1, 2], [0], [0]>} : vector<2x8x8xbf16>, vector<2x8x16xbf16>, vector<2x8x16xf32> -> vector<2x8x16xf32>
    "tpu.trace_stop"() : () -> ()
    %45 = vector.extract_strided_slice %11 {offsets = [0, 16], sizes = [16, 16], strides = [1, 1]} : vector<16x96xf32> to vector<16x16xf32>
    %46 = vector.shape_cast %45 : vector<16x16xf32> to vector<2x8x16xf32>
    %47 = vector.extract_strided_slice %11 {offsets = [0, 48], sizes = [16, 16], strides = [1, 1]} : vector<16x96xf32> to vector<16x16xf32>
    %48 = vector.shape_cast %47 : vector<16x16xf32> to vector<2x8x16xf32>
    %49 = vector.extract_strided_slice %11 {offsets = [0, 80], sizes = [16, 16], strides = [1, 1]} : vector<16x96xf32> to vector<16x16xf32>
    %50 = vector.shape_cast %49 : vector<16x16xf32> to vector<2x8x16xf32>
    %51 = arith.truncf %46 : vector<2x8x16xf32> to vector<2x8x16xbf16>
    %52 = arith.truncf %48 : vector<2x8x16xf32> to vector<2x8x16xbf16>
    "tpu.trace_start"() <{level = 10 : i32, message = "bqd,bkd->bqk"}> : () -> ()
    %cst_16 = arith.constant dense<0.000000e+00> : vector<2x8x8xf32>
    %53 = tpu.matmul %51, %52, %cst_16 {dimension_numbers = #tpu.dot_dimension_numbers<[2], [2], [1], [1], [0, 0, 0, 1, 1, 1], [0], [0]>} : vector<2x8x16xbf16>, vector<2x8x16xbf16>, vector<2x8x8xf32> -> vector<2x8x8xf32>
    "tpu.trace_stop"() : () -> ()
    %54 = arith.addf %53, %21 : vector<2x8x8xf32>
    %cst_17 = arith.constant dense<0xFF800000> : vector<2x8xf32>
    %55 = vector.multi_reduction <maximumf>, %54, %cst_17 [2] : vector<2x8x8xf32> to vector<2x8xf32>
    %56 = vector.shape_cast %55 : vector<2x8xf32> to vector<2x8x1xf32>
    %57 = vector.broadcast %56 : vector<2x8x1xf32> to vector<2x8x8xf32>
    %58 = arith.subf %54, %57 : vector<2x8x8xf32>
    %59 = math.exp %58 : vector<2x8x8xf32>
    %cst_18 = arith.constant dense<0.000000e+00> : vector<2x8xf32>
    %60 = vector.multi_reduction <add>, %59, %cst_18 [2] : vector<2x8x8xf32> to vector<2x8xf32>
    %61 = vector.shape_cast %60 : vector<2x8xf32> to vector<2x8x1xf32>
    %62 = tpu.reciprocal %61 {approx = true} : vector<2x8x1xf32> -> vector<2x8x1xf32>
    %63 = vector.broadcast %62 : vector<2x8x1xf32> to vector<2x8x8xf32>
    %64 = arith.mulf %59, %63 : vector<2x8x8xf32>
    %65 = arith.truncf %64 : vector<2x8x8xf32> to vector<2x8x8xbf16>
    %66 = arith.truncf %50 : vector<2x8x16xf32> to vector<2x8x16xbf16>
    "tpu.trace_start"() <{level = 10 : i32, message = "bqk,bkd->bqd"}> : () -> ()
    %cst_19 = arith.constant dense<0.000000e+00> : vector<2x8x16xf32>
    %67 = tpu.matmul %65, %66, %cst_19 {dimension_numbers = #tpu.dot_dimension_numbers<[2], [1], [1], [2], [0, 0, 0, 1, 1, 2], [0], [0]>} : vector<2x8x8xbf16>, vector<2x8x16xbf16>, vector<2x8x16xf32> -> vector<2x8x16xf32>
    "tpu.trace_stop"() : () -> ()
    %68 = tpu.concatenate %44, %67 in 2 : vector<2x8x16xf32>, vector<2x8x16xf32> -> vector<2x8x32xf32>
    %69 = vector.shape_cast %68 : vector<2x8x32xf32> to vector<16x32xf32>
    %70 = arith.truncf %69 : vector<16x32xf32> to vector<16x32xbf16>
    %c0_20 = arith.constant 0 : index
    %c0_21 = arith.constant 0 : index
    %c0_22 = arith.constant 0 : index
    %71 = vector.load %arg5[%c0_20, %c0_21, %c0_22] : memref<1x32x32xbf16, #tpu.memory_space<vmem>>, vector<1x32x32xbf16>
    %72 = vector.shape_cast %71 : vector<1x32x32xbf16> to vector<32x32xbf16>
    %cst_23 = arith.constant dense<0.000000e+00> : vector<16x32xf32>
    %73 = tpu.matmul %70, %72, %cst_23 {dimension_numbers = #tpu.dot_dimension_numbers<[1], [0], [0], [1], [0, 0, 1, 1], [], []>} : vector<16x32xbf16>, vector<32x32xbf16>, vector<16x32xf32> -> vector<16x32xf32>
    %c0_24 = arith.constant 0 : index
    %c0_25 = arith.constant 0 : index
    %c0_26 = arith.constant 0 : index
    %74 = vector.load %arg6[%c0_24, %c0_25, %c0_26] : memref<1x1x32xf32, #tpu.memory_space<vmem>>, vector<1x1x32xf32>
    %75 = vector.shape_cast %74 : vector<1x1x32xf32> to vector<1x32xf32>
    %76 = vector.broadcast %75 : vector<1x32xf32> to vector<16x32xf32>
    %77 = arith.addf %73, %76 : vector<16x32xf32>
    %78 = arith.addf %3, %77 : vector<16x32xf32>
    %cst_27 = arith.constant dense<0.000000e+00> : vector<16xf32>
    %79 = vector.multi_reduction <add>, %78, %cst_27 [1] : vector<16x32xf32> to vector<16xf32>
    %80 = vector.shape_cast %79 : vector<16xf32> to vector<16x1xf32>
    %cst_28 = arith.constant 3.200000e+01 : f32
    %81 = vector.broadcast %cst_28 : f32 to vector<16x1xf32>
    %82 = arith.divf %80, %81 : vector<16x1xf32>
    %83 = vector.broadcast %82 : vector<16x1xf32> to vector<16x32xf32>
    %84 = arith.subf %78, %83 : vector<16x32xf32>
    %85 = arith.mulf %84, %84 : vector<16x32xf32>
    %cst_29 = arith.constant dense<0.000000e+00> : vector<16xf32>
    %86 = vector.multi_reduction <add>, %85, %cst_29 [1] : vector<16x32xf32> to vector<16xf32>
    %87 = vector.shape_cast %86 : vector<16xf32> to vector<16x1xf32>
    %cst_30 = arith.constant 3.200000e+01 : f32
    %88 = vector.broadcast %cst_30 : f32 to vector<16x1xf32>
    %89 = arith.divf %87, %88 : vector<16x1xf32>
    %90 = vector.broadcast %82 : vector<16x1xf32> to vector<16x32xf32>
    %91 = arith.subf %78, %90 : vector<16x32xf32>
    %cst_31 = arith.constant 9.99999974E-6 : f32
    %92 = vector.broadcast %cst_31 : f32 to vector<16x1xf32>
    %93 = arith.addf %89, %92 : vector<16x1xf32>
    %94 = math.rsqrt %93 : vector<16x1xf32>
    %95 = vector.broadcast %94 : vector<16x1xf32> to vector<16x32xf32>
    %96 = arith.mulf %91, %95 : vector<16x32xf32>
    %c0_32 = arith.constant 0 : index
    %c0_33 = arith.constant 0 : index
    %c0_34 = arith.constant 0 : index
    %97 = vector.load %arg7[%c0_32, %c0_33, %c0_34] : memref<1x1x32xf32, #tpu.memory_space<vmem>>, vector<1x1x32xf32>
    %98 = vector.shape_cast %97 : vector<1x1x32xf32> to vector<1x32xf32>
    %99 = vector.broadcast %98 : vector<1x32xf32> to vector<16x32xf32>
    %100 = arith.mulf %96, %99 : vector<16x32xf32>
    %c0_35 = arith.constant 0 : index
    %c0_36 = arith.constant 0 : index
    %c0_37 = arith.constant 0 : index
    %101 = vector.load %arg8[%c0_35, %c0_36, %c0_37] : memref<1x1x32xf32, #tpu.memory_space<vmem>>, vector<1x1x32xf32>
    %102 = vector.shape_cast %101 : vector<1x1x32xf32> to vector<1x32xf32>
    %103 = vector.broadcast %102 : vector<1x32xf32> to vector<16x32xf32>
    %104 = arith.addf %100, %103 : vector<16x32xf32>
    %105 = arith.truncf %104 : vector<16x32xf32> to vector<16x32xbf16>
    %c0_38 = arith.constant 0 : index
    %c0_39 = arith.constant 0 : index
    %c0_40 = arith.constant 0 : index
    %106 = vector.load %arg9[%c0_38, %c0_39, %c0_40] : memref<1x32x64xbf16, #tpu.memory_space<vmem>>, vector<1x32x64xbf16>
    %107 = vector.shape_cast %106 : vector<1x32x64xbf16> to vector<32x64xbf16>
    %cst_41 = arith.constant dense<0.000000e+00> : vector<16x64xf32>
    %108 = tpu.matmul %105, %107, %cst_41 {dimension_numbers = #tpu.dot_dimension_numbers<[1], [0], [0], [1], [0, 0, 1, 1], [], []>} : vector<16x32xbf16>, vector<32x64xbf16>, vector<16x64xf32> -> vector<16x64xf32>
    %c0_42 = arith.constant 0 : index
    %c0_43 = arith.constant 0 : index
    %c0_44 = arith.constant 0 : index
    %109 = vector.load %arg10[%c0_42, %c0_43, %c0_44] : memref<1x1x64xf32, #tpu.memory_space<vmem>>, vector<1x1x64xf32>
    %110 = vector.shape_cast %109 : vector<1x1x64xf32> to vector<1x64xf32>
    %111 = vector.broadcast %110 : vector<1x64xf32> to vector<16x64xf32>
    %112 = arith.addf %108, %111 : vector<16x64xf32>
    %cst_45 = arith.constant 0.000000e+00 : f32
    %113 = vector.broadcast %cst_45 : f32 to vector<16x64xf32>
    %114 = arith.maximumf %112, %113 : vector<16x64xf32>
    %115 = arith.truncf %114 : vector<16x64xf32> to vector<16x64xbf16>
    %c0_46 = arith.constant 0 : index
    %c0_47 = arith.constant 0 : index
    %c0_48 = arith.constant 0 : index
    %116 = vector.load %arg11[%c0_46, %c0_47, %c0_48] : memref<1x64x32xbf16, #tpu.memory_space<vmem>>, vector<1x64x32xbf16>
    %117 = vector.shape_cast %116 : vector<1x64x32xbf16> to vector<64x32xbf16>
    %cst_49 = arith.constant dense<0.000000e+00> : vector<16x32xf32>
    %118 = tpu.matmul %115, %117, %cst_49 {dimension_numbers = #tpu.dot_dimension_numbers<[1], [0], [0], [1], [0, 0, 1, 1], [], []>} : vector<16x64xbf16>, vector<64x32xbf16>, vector<16x32xf32> -> vector<16x32xf32>
    %c0_50 = arith.constant 0 : index
    %c0_51 = arith.constant 0 : index
    %c0_52 = arith.constant 0 : index
    %119 = vector.load %arg12[%c0_50, %c0_51, %c0_52] : memref<1x1x32xf32, #tpu.memory_space<vmem>>, vector<1x1x32xf32>
    %120 = vector.shape_cast %119 : vector<1x1x32xf32> to vector<1x32xf32>
    %121 = vector.broadcast %120 : vector<1x32xf32> to vector<16x32xf32>
    %122 = arith.addf %118, %121 : vector<16x32xf32>
    %123 = arith.addf %104, %122 : vector<16x32xf32>
    %cst_53 = arith.constant dense<0.000000e+00> : vector<16xf32>
    %124 = vector.multi_reduction <add>, %123, %cst_53 [1] : vector<16x32xf32> to vector<16xf32>
    %125 = vector.shape_cast %124 : vector<16xf32> to vector<16x1xf32>
    %cst_54 = arith.constant 3.200000e+01 : f32
    %126 = vector.broadcast %cst_54 : f32 to vector<16x1xf32>
    %127 = arith.divf %125, %126 : vector<16x1xf32>
    %128 = vector.broadcast %127 : vector<16x1xf32> to vector<16x32xf32>
    %129 = arith.subf %123, %128 : vector<16x32xf32>
    %130 = arith.mulf %129, %129 : vector<16x32xf32>
    %cst_55 = arith.constant dense<0.000000e+00> : vector<16xf32>
    %131 = vector.multi_reduction <add>, %130, %cst_55 [1] : vector<16x32xf32> to vector<16xf32>
    %132 = vector.shape_cast %131 : vector<16xf32> to vector<16x1xf32>
    %cst_56 = arith.constant 3.200000e+01 : f32
    %133 = vector.broadcast %cst_56 : f32 to vector<16x1xf32>
    %134 = arith.divf %132, %133 : vector<16x1xf32>
    %135 = vector.broadcast %127 : vector<16x1xf32> to vector<16x32xf32>
    %136 = arith.subf %123, %135 : vector<16x32xf32>
    %cst_57 = arith.constant 9.99999974E-6 : f32
    %137 = vector.broadcast %cst_57 : f32 to vector<16x1xf32>
    %138 = arith.addf %134, %137 : vector<16x1xf32>
    %139 = math.rsqrt %138 : vector<16x1xf32>
    %140 = vector.broadcast %139 : vector<16x1xf32> to vector<16x32xf32>
    %141 = arith.mulf %136, %140 : vector<16x32xf32>
    %c0_58 = arith.constant 0 : index
    %c0_59 = arith.constant 0 : index
    %c0_60 = arith.constant 0 : index
    %142 = vector.load %arg13[%c0_58, %c0_59, %c0_60] : memref<1x1x32xf32, #tpu.memory_space<vmem>>, vector<1x1x32xf32>
    %143 = vector.shape_cast %142 : vector<1x1x32xf32> to vector<1x32xf32>
    %144 = vector.broadcast %143 : vector<1x32xf32> to vector<16x32xf32>
    %145 = arith.mulf %141, %144 : vector<16x32xf32>
    %c0_61 = arith.constant 0 : index
    %c0_62 = arith.constant 0 : index
    %c0_63 = arith.constant 0 : index
    %146 = vector.load %arg14[%c0_61, %c0_62, %c0_63] : memref<1x1x32xf32, #tpu.memory_space<vmem>>, vector<1x1x32xf32>
    %147 = vector.shape_cast %146 : vector<1x1x32xf32> to vector<1x32xf32>
    %148 = vector.broadcast %147 : vector<1x32xf32> to vector<16x32xf32>
    %149 = arith.addf %145, %148 : vector<16x32xf32>
    %c0_64 = arith.constant 0 : index
    %c0_65 = arith.constant 0 : index
    %150 = vector.load %arg16[%c0_64, %c0_65] : memref<16x32xf32, #tpu.memory_space<vmem>>, vector<16x32xf32>
    tpu.vector_store %arg16[%c0_64, %c0_65], %149 {strides = array<i32>} : memref<16x32xf32, #tpu.memory_space<vmem>>, vector<16x32xf32>,
    %c0_66 = arith.constant 0 : index
    %c0_67 = arith.constant 0 : index
    %151 = vector.load %arg15[%c0_66, %c0_67] : memref<16x32xf32, #tpu.memory_space<vmem>>, vector<16x32xf32>
    tpu.vector_store %arg15[%c0_66, %c0_67], %149 {strides = array<i32>} : memref<16x32xf32, #tpu.memory_space<vmem>>, vector<16x32xf32>,
    return
  }
  func.func @transform_0(%arg0: i32) -> (i32, i32) {
    %c0_i32 = arith.constant 0 : i32
    %c0_i32_0 = arith.constant 0 : i32
    %c0_i32_1 = arith.constant 0 : i32
    return %c0_i32, %c0_i32_0 : i32, i32
  }
  func.func @transform_1(%arg0: i32) -> (i32, i32) {
    %c0_i32 = arith.constant 0 : i32
    %c0_i32_0 = arith.constant 0 : i32
    %c0_i32_1 = arith.constant 0 : i32
    return %c0_i32, %c0_i32_0 : i32, i32
  }
  func.func @transform_2(%arg0: i32) -> (i32, i32, i32) {
    %c0_i32 = arith.constant 0 : i32
    %c0_i32_0 = arith.constant 0 : i32
    %c0_i32_1 = arith.constant 0 : i32
    return %arg0, %c0_i32, %c0_i32_0 : i32, i32, i32
  }
  func.func @transform_3(%arg0: i32) -> (i32, i32, i32) {
    %c0_i32 = arith.constant 0 : i32
    %c0_i32_0 = arith.constant 0 : i32
    %c0_i32_1 = arith.constant 0 : i32
    return %arg0, %c0_i32, %c0_i32_0 : i32, i32, i32
  }
  func.func @transform_4(%arg0: i32) -> (i32, i32, i32) {
    %c0_i32 = arith.constant 0 : i32
    %c0_i32_0 = arith.constant 0 : i32
    %c0_i32_1 = arith.constant 0 : i32
    return %arg0, %c0_i32, %c0_i32_0 : i32, i32, i32
  }
  func.func @transform_5(%arg0: i32) -> (i32, i32, i32) {
    %c0_i32 = arith.constant 0 : i32
    %c0_i32_0 = arith.constant 0 : i32
    %c0_i32_1 = arith.constant 0 : i32
    return %arg0, %c0_i32, %c0_i32_0 : i32, i32, i32
  }
  func.func @transform_6(%arg0: i32) -> (i32, i32, i32) {
    %c0_i32 = arith.constant 0 : i32
    %c0_i32_0 = arith.constant 0 : i32
    %c0_i32_1 = arith.constant 0 : i32
    return %arg0, %c0_i32, %c0_i32_0 : i32, i32, i32
  }
  func.func @transform_7(%arg0: i32) -> (i32, i32, i32) {
    %c0_i32 = arith.constant 0 : i32
    %c0_i32_0 = arith.constant 0 : i32
    %c0_i32_1 = arith.constant 0 : i32
    return %arg0, %c0_i32, %c0_i32_0 : i32, i32, i32
  }
  func.func @transform_8(%arg0: i32) -> (i32, i32, i32) {
    %c0_i32 = arith.constant 0 : i32
    %c0_i32_0 = arith.constant 0 : i32
    %c0_i32_1 = arith.constant 0 : i32
    return %arg0, %c0_i32, %c0_i32_0 : i32, i32, i32
  }
  func.func @transform_9(%arg0: i32) -> (i32, i32, i32) {
    %c0_i32 = arith.constant 0 : i32
    %c0_i32_0 = arith.constant 0 : i32
    %c0_i32_1 = arith.constant 0 : i32
    return %arg0, %c0_i32, %c0_i32_0 : i32, i32, i32
  }
  func.func @transform_10(%arg0: i32) -> (i32, i32, i32) {
    %c0_i32 = arith.constant 0 : i32
    %c0_i32_0 = arith.constant 0 : i32
    %c0_i32_1 = arith.constant 0 : i32
    return %arg0, %c0_i32, %c0_i32_0 : i32, i32, i32
  }
  func.func @transform_11(%arg0: i32) -> (i32, i32, i32) {
    %c0_i32 = arith.constant 0 : i32
    %c0_i32_0 = arith.constant 0 : i32
    %c0_i32_1 = arith.constant 0 : i32
    return %arg0, %c0_i32, %c0_i32_0 : i32, i32, i32
  }
  func.func @transform_12(%arg0: i32) -> (i32, i32, i32) {
    %c0_i32 = arith.constant 0 : i32
    %c0_i32_0 = arith.constant 0 : i32
    %c0_i32_1 = arith.constant 0 : i32
    return %arg0, %c0_i32, %c0_i32_0 : i32, i32, i32
  }
  func.func @transform_13(%arg0: i32) -> (i32, i32, i32) {
    %c0_i32 = arith.constant 0 : i32
    %c0_i32_0 = arith.constant 0 : i32
    %c0_i32_1 = arith.constant 0 : i32
    return %arg0, %c0_i32, %c0_i32_0 : i32, i32, i32
  }
  func.func @transform_14(%arg0: i32) -> (i32, i32) {
    %c0_i32 = arith.constant 0 : i32
    %c0_i32_0 = arith.constant 0 : i32
    %c0_i32_1 = arith.constant 0 : i32
    return %c0_i32, %c0_i32_0 : i32, i32
  }
}

</mosaic_0001>

<llo_original>
// kernel: gpt_forward.3
$region0: #{gpt_forward.3}
  #allocation0 [shape = 'u32[]', space=smem, size = 0x4, offset = 0x4, fixed_abs, tag = 'smem constant byte address 0x4 - core index']
  #allocation1 [shape = 'u32[144,128]{1,0:T(1,128)}', space=vmem, size = 0x12000, scoped, tag = 'internal scratch']
  %s0 = inlined_call_operand.vmem [shape: f32[16,32], index: 0, kind: input, shape index: {}]
  %s1 = inlined_call_operand.vmem [shape: bf16[32,64], index: 1, kind: input, shape index: {}]
  %s2 = inlined_call_operand.vmem [shape: f32[1,64], index: 2, kind: input, shape index: {}]
  %s3 = inlined_call_operand.hbm [shape: f32[16,64], index: 3, kind: output, shape index: {}]
  %s4 = sld [smem:[#allocation0]]
  $region22: #{gpt_forward.3} parent=0
    _
  %s6 = ssub.s32 1, %s4
  %s7 = scalar_select 0, %s6, %s4
  $region1: #{gpt_forward.3} parent=0
    #allocation2 [shape = 'u8[8192]{0}', space=vmem, size = 0x2000, scoped, tag = 'output window, operand 0, single buffered']
    #allocation3 [shape = 's32[1]{0}', space=sflag, size = 0x4, scoped, tag = 'scoped memory for gpt_forward.3']
    %8 = vsyncpa [#allocation3], 0
    // Predicated region
    $region2: #{gpt_forward.3} parent=1 // pred_check
      _
    $region3: #{gpt_forward.3} parent=1 // pred_check_branch
      %10 = sbr.rel (0) target = $region5
    $region4: #{gpt_forward.3} parent=1 // pred_region
      _
    $region5: #{gpt_forward.3} parent=1 // pred_fallthru
      _
    // Predicated region
    $region6: #{gpt_forward.3} parent=1 // pred_check
      _
    $region7: #{gpt_forward.3} parent=1 // pred_check_branch
      %12 = sbr.rel (0) target = $region9
    $region8: #{gpt_forward.3} parent=1 // pred_region
      _
    $region9: #{gpt_forward.3} parent=1 // pred_fallthru
      _
    // Predicated region
    $region10: #{gpt_forward.3} parent=1 // pred_check
      _
    $region11: #{gpt_forward.3} parent=1 // pred_check_branch
      %14 = sbr.rel (0) target = $region13
    $region12: #{gpt_forward.3} parent=1 // pred_region
      _
    $region13: #{gpt_forward.3} parent=1 // pred_fallthru
      _
    %v16 = vld [vmem:[%s0] sm:$0xff]
    %v17 = vld [vmem:[%s0 + $0x8] sm:$0xff]
    %v18 = vpack.c.bf16 %v17, %v16
    %v19 = vld [vmem:[%s1] sm:$0xf]
    %v20 = vld [vmem:[%s1 + $0x4] sm:$0xf]
    %v21 = vld [vmem:[%s1 + $0x8] sm:$0xf]
    %v22 = vld [vmem:[%s1 + $0xc] sm:$0xf]
    %v23 = vld [vmem:[%s2] sm:$0x1]
    %v25 = vlaneseq
    %v26 = vshrl.u32 %v25, 7
    %v27 = vsub.s32 0, %v26
    %v28 = vrot.slane %v23, %v27
    %v34 = vunpack.c.l.b16 %v19
    %v35 = vunpack.c.l.b16 %v20
    %v36 = vunpack.c.l.b16 %v21
    %v37 = vunpack.c.l.b16 %v22
    %v38 = vpack.c.b16 %v35, %v34
    %v39 = vpack.c.b16 %v37, %v36
    %vm42 = vcmask 261120
    %v44 = vsel %vm42, %v18, 0
    %46 = vmatprep.subr.bf16.mxu0 0
    %47 = vmatpush1.bf16.msra.mxu0 %v38
    %48 = vmatprep.subr.bf16.mxu0 0
    %49 = vmatpush1.bf16.msra.mxu0 %v39
    %50 = vmatprep.subr.bf16.mxu0 0
    %51 = vmatpush1.bf16.msra.mxu0 0
    %52 = vmatprep.subr.bf16.mxu0 0
    %53 = vmatpush1.bf16.msra.mxu0 0
    %54 = vmatprep.subr.bf16.mxu0 0
    %55 = vmatpush1.bf16.msra.mxu0 0
    %56 = vmatprep.subr.bf16.mxu0 0
    %57 = vmatpush1.bf16.msra.mxu0 0
    %58 = vmatprep.subr.bf16.mxu0 0
    %59 = vmatpush1.bf16.msra.mxu0 0
    %60 = vmatprep.subr.bf16.mxu0 0
    %61 = vmatpush1.bf16.msra.mxu0 0
    %62 = vmatprep.subr.bf16.mxu0 0
    %63 = vmatpush1.bf16.msra.mxu0 0
    %64 = vmatprep.subr.bf16.mxu0 0
    %65 = vmatpush1.bf16.msra.mxu0 0
    %66 = vmatprep.subr.bf16.mxu0 0
    %67 = vmatpush1.bf16.msra.mxu0 0
    %68 = vmatprep.subr.bf16.mxu0 0
    %69 = vmatpush1.bf16.msra.mxu0 0
    %70 = vmatprep.subr.bf16.mxu0 0
    %71 = vmatpush1.bf16.msra.mxu0 0
    %72 = vmatprep.subr.bf16.mxu0 0
    %73 = vmatpush1.bf16.msra.mxu0 0
    %74 = vmatprep.subr.bf16.mxu0 0
    %75 = vmatpush1.bf16.msra.mxu0 0
    %76 = vmatprep.subr.bf16.mxu0 0
    %77 = vmatpush1.bf16.msra.mxu0 0
    %78 = vmatprep.mubr.bf16.mxu0 0
    %79 = vmatmul.mubr.bf16.gmra.mrb[0].mxu0 %v44
    %v80 = vpop.f32.mrb[0].mxu0
    %v81 = vadd.f32 %v28, %v80
    %v82 = vpop.f32.mrb[0].mxu0
    %v83 = vpop.f32.mrb[0].mxu0
    %v84 = vadd.f32 %v28, %v83
    %v85 = vpop.f32.mrb[0].mxu0
    %86 = vdwg.mxu0
    %vm87 = vcmask 523264
    %88 = vst.msk [vmem:[#allocation2] sm:$0xff] %vm87, %v81
    %89 = vst.msk [vmem:[#allocation2 + $0x8] sm:$0xff] %vm87, %v84
    // Predicated region
    $region14: #{gpt_forward.3} parent=1 // pred_check
      _
    $region15: #{gpt_forward.3} parent=1 // pred_check_branch
      %91 = sbr.rel (0) target = $region17
    $region16: #{gpt_forward.3} parent=1 // pred_region
      %s93 = ssub.s32 256, 256
      %94 = vsyncadd [#allocation3], %s93
      %s95 = sshll.u32 [#allocation2], 4
      %s96 = int_to_ptr.vmem [resolvable:$true] %s95
      %101 = dma.vmem_to_hbm [thread:$0]  %s96, 256, %s3, [#allocation3], 128, 128, 8
    $region17: #{gpt_forward.3} parent=1 // pred_fallthru
      _
    // Predicated region
    $region18: #{gpt_forward.3} parent=1 // pred_check
      _
    $region19: #{gpt_forward.3} parent=1 // pred_check_branch
      %103 = sbr.rel (0) target = $region21
    $region20: #{gpt_forward.3} parent=1 // pred_region
      %104 = dma.done [#allocation3], 256
    $region21: #{gpt_forward.3} parent=1 // pred_fallthru
      _
    %105 = vsyncpa [#allocation3], 1

// kernel: gpt_forward.2
$region0: #{gpt_forward.2}
  #allocation0 [shape = 'u32[]', space=smem, size = 0x4, offset = 0x4, fixed_abs, tag = 'smem constant byte address 0x4 - core index']
  #allocation1 [shape = 'u32[144,128]{1,0:T(1,128)}', space=vmem, size = 0x12000, scoped, tag = 'internal scratch']
  #allocation2 [shape = 'f32[16,32]{1,0:T(8,128)}', space=vmem, size = 0x2000, scoped, tag = 'scratch operand']
  %s0 = inlined_call_operand.vmem [shape: f32[16,32], index: 0, kind: input, shape index: {}]
  %s1 = inlined_call_operand.vmem [shape: f32[2,8], index: 1, kind: input, shape index: {}]
  %s2 = inlined_call_operand.vmem [shape: bf16[2,32,96], index: 2, kind: input, shape index: {}]
  %s3 = inlined_call_operand.vmem [shape: f32[2,1,96], index: 3, kind: input, shape index: {}]
  %s4 = inlined_call_operand.vmem [shape: bf16[2,32,32], index: 4, kind: input, shape index: {}]
  %s5 = inlined_call_operand.vmem [shape: f32[2,1,32], index: 5, kind: input, shape index: {}]
  %s6 = inlined_call_operand.vmem [shape: f32[2,1,32], index: 6, kind: input, shape index: {}]
  %s7 = inlined_call_operand.vmem [shape: f32[2,1,32], index: 7, kind: input, shape index: {}]
  %s8 = inlined_call_operand.vmem [shape: bf16[2,32,64], index: 8, kind: input, shape index: {}]
  %s9 = inlined_call_operand.vmem [shape: f32[2,1,64], index: 9, kind: input, shape index: {}]
  %s10 = inlined_call_operand.vmem [shape: bf16[2,64,32], index: 10, kind: input, shape index: {}]
  %s11 = inlined_call_operand.vmem [shape: f32[2,1,32], index: 11, kind: input, shape index: {}]
  %s12 = inlined_call_operand.vmem [shape: f32[2,1,32], index: 12, kind: input, shape index: {}]
  %s13 = inlined_call_operand.vmem [shape: f32[2,1,32], index: 13, kind: input, shape index: {}]
  %s14 = inlined_call_operand.vmem [shape: f32[16,32], index: 14, kind: output, shape index: {}]
  %s15 = sld [smem:[#allocation0]]
  $region93: #{gpt_forward.2} parent=0
    _
  %s17 = ssub.s32 1, %s15
  %s18 = scalar_select 0, %s17, %s15
  loop: start=0, step=1, limit=4
  $region2: #{gpt_forward.2} parent=0 // loop_pre_header
    _
  $region3: #{gpt_forward.2} parent=0 // loop_header
    %s20 = sphi 0, %s24
    %p21 = scmp.ge.s32.totalorder %s20, 4
    %s28 = sphi 0, %s28
    %s30 = sphi 0, %s28
    %s31 = sphi 0, %s30
    %s45 = sphi 0, %s31
    %s49 = sphi 0, %s49
    %s51 = sphi 0, %s49
    %s52 = sphi 0, %s51
    %s66 = sphi 0, %s52
    %s72 = sphi 0, %s74
    %s75 = sphi 0, %s72
    %s76 = sphi 0, %s75
    %s92 = sphi 0, %s76
    %s98 = sphi 0, %s100
    %s101 = sphi 0, %s98
    %s102 = sphi 0, %s101
    %s118 = sphi 0, %s102
    %s124 = sphi 0, %s126
    %s127 = sphi 0, %s124
    %s128 = sphi 0, %s127
    %s144 = sphi 0, %s128
    %s150 = sphi 0, %s152
    %s153 = sphi 0, %s150
    %s154 = sphi 0, %s153
    %s170 = sphi 0, %s154
    %s176 = sphi 0, %s178
    %s179 = sphi 0, %s176
    %s180 = sphi 0, %s179
    %s196 = sphi 0, %s180
    %s202 = sphi 0, %s204
    %s205 = sphi 0, %s202
    %s206 = sphi 0, %s205
    %s222 = sphi 0, %s206
    %s228 = sphi 0, %s230
    %s231 = sphi 0, %s228
    %s232 = sphi 0, %s231
    %s248 = sphi 0, %s232
    %s254 = sphi 0, %s256
    %s257 = sphi 0, %s254
    %s258 = sphi 0, %s257
    %s274 = sphi 0, %s258
    %s280 = sphi 0, %s282
    %s283 = sphi 0, %s280
    %s284 = sphi 0, %s283
    %s300 = sphi 0, %s284
    %s306 = sphi 0, %s308
    %s309 = sphi 0, %s306
    %s310 = sphi 0, %s309
    %s326 = sphi 0, %s310
    %s332 = sphi 0, %s334
    %s335 = sphi 0, %s332
    %s336 = sphi 0, %s335
    %s352 = sphi 0, %s336
    %s358 = sphi 0, %s360
    %s361 = sphi 0, %s358
    %s362 = sphi 0, %s361
    %s378 = sphi 0, %s362
    %s382 = sphi 0, %s382
    %s384 = sphi 0, %s382
    %s385 = sphi 0, %s384
    %s399 = sphi 0, %s385
  $region4: #{gpt_forward.2} parent=0 // loop_header_branch
    %23 = sbr.rel (%p21) target = $region8
  $region5: #{gpt_forward.2} parent=0 // loop_body
    %s25 = ssub.s32 %s20, 1
    %s26 = ssub.s32 %s20, 2
    %s27 = sadd.s32 %s20, 1
    %s29 = sadd.s32 %s28, 1
    %p32 = scmp.eq.s32.totalorder %s20, 1
    %p33 = scmp.ne.s32.totalorder %s28, %s30
    %p34 = scmp.eq.s32.totalorder %s20, 0
    %p35 = por %p33, %p34
    %p36 = scmp.ne.s32.totalorder %s28, %s30
    %p37 = scmp.eq.s32.totalorder %s25, 1
    %p38 = por %p36, %p37
    %p39 = scmp.ne.s32.totalorder %s30, %s31
    %p40 = scmp.eq.s32.totalorder %s25, 0
    %p41 = por %p39, %p40
    %p42 = scmp.ne.s32.totalorder %s30, %s31
    %p43 = scmp.eq.s32.totalorder %s26, 1
    %p44 = por %p42, %p43
    %p46 = scmp.ne.s32.totalorder %s31, %s45
    %p47 = scmp.eq.s32.totalorder %s26, 0
    %p48 = por %p46, %p47
    %s50 = sadd.s32 %s49, 1
    %p53 = scmp.eq.s32.totalorder %s20, 1
    %p54 = scmp.ne.s32.totalorder %s49, %s51
    %p55 = scmp.eq.s32.totalorder %s20, 0
    %p56 = por %p54, %p55
    %p57 = scmp.ne.s32.totalorder %s49, %s51
    %p58 = scmp.eq.s32.totalorder %s25, 1
    %p59 = por %p57, %p58
    %p60 = scmp.ne.s32.totalorder %s51, %s52
    %p61 = scmp.eq.s32.totalorder %s25, 0
    %p62 = por %p60, %p61
    %p63 = scmp.ne.s32.totalorder %s51, %s52
    %p64 = scmp.eq.s32.totalorder %s26, 1
    %p65 = por %p63, %p64
    %p67 = scmp.ne.s32.totalorder %s52, %s66
    %p68 = scmp.eq.s32.totalorder %s26, 0
    %p69 = por %p67, %p68
    %s70 = ssub.s32 %s20, %s27
    %p71 = scmp.eq.s32.totalorder %s70, 0
    %s73 = sadd.s32 %s72, 1
    %s74 = scalar_select %p71, %s72, %s73
    %p77 = pneg %p71
    %p78 = scmp.eq.s32.totalorder %s20, 1
    %p79 = por %p77, %p78
    %p80 = scmp.ne.s32.totalorder %s72, %s75
    %p81 = scmp.eq.s32.totalorder %s20, 0
    %p82 = por %p80, %p81
    %p83 = scmp.ne.s32.totalorder %s72, %s75
    %p84 = scmp.eq.s32.totalorder %s25, 1
    %p85 = por %p83, %p84
    %p86 = scmp.ne.s32.totalorder %s75, %s76
    %p87 = scmp.eq.s32.totalorder %s25, 0
    %p88 = por %p86, %p87
    %p89 = scmp.ne.s32.totalorder %s75, %s76
    %p90 = scmp.eq.s32.totalorder %s26, 1
    %p91 = por %p89, %p90
    %p93 = scmp.ne.s32.totalorder %s76, %s92
    %p94 = scmp.eq.s32.totalorder %s26, 0
    %p95 = por %p93, %p94
    %s96 = ssub.s32 %s20, %s27
    %p97 = scmp.eq.s32.totalorder %s96, 0
    %s99 = sadd.s32 %s98, 1
    %s100 = scalar_select %p97, %s98, %s99
    %p103 = pneg %p97
    %p104 = scmp.eq.s32.totalorder %s20, 1
    %p105 = por %p103, %p104
    %p106 = scmp.ne.s32.totalorder %s98, %s101
    %p107 = scmp.eq.s32.totalorder %s20, 0
    %p108 = por %p106, %p107
    %p109 = scmp.ne.s32.totalorder %s98, %s101
    %p110 = scmp.eq.s32.totalorder %s25, 1
    %p111 = por %p109, %p110
    %p112 = scmp.ne.s32.totalorder %s101, %s102
    %p113 = scmp.eq.s32.totalorder %s25, 0
    %p114 = por %p112, %p113
    %p115 = scmp.ne.s32.totalorder %s101, %s102
    %p116 = scmp.eq.s32.totalorder %s26, 1
    %p117 = por %p115, %p116
    %p119 = scmp.ne.s32.totalorder %s102, %s118
    %p120 = scmp.eq.s32.totalorder %s26, 0
    %p121 = por %p119, %p120
    %s122 = ssub.s32 %s20, %s27
    %p123 = scmp.eq.s32.totalorder %s122, 0
    %s125 = sadd.s32 %s124, 1
    %s126 = scalar_select %p123, %s124, %s125
    %p129 = pneg %p123
    %p130 = scmp.eq.s32.totalorder %s20, 1
    %p131 = por %p129, %p130
    %p132 = scmp.ne.s32.totalorder %s124, %s127
    %p133 = scmp.eq.s32.totalorder %s20, 0
    %p134 = por %p132, %p133
    %p135 = scmp.ne.s32.totalorder %s124, %s127
    %p136 = scmp.eq.s32.totalorder %s25, 1
    %p137 = por %p135, %p136
    %p138 = scmp.ne.s32.totalorder %s127, %s128
    %p139 = scmp.eq.s32.totalorder %s25, 0
    %p140 = por %p138, %p139
    %p141 = scmp.ne.s32.totalorder %s127, %s128
    %p142 = scmp.eq.s32.totalorder %s26, 1
    %p143 = por %p141, %p142
    %p145 = scmp.ne.s32.totalorder %s128, %s144
    %p146 = scmp.eq.s32.totalorder %s26, 0
    %p147 = por %p145, %p146
    %s148 = ssub.s32 %s20, %s27
    %p149 = scmp.eq.s32.totalorder %s148, 0
    %s151 = sadd.s32 %s150, 1
    %s152 = scalar_select %p149, %s150, %s151
    %p155 = pneg %p149
    %p156 = scmp.eq.s32.totalorder %s20, 1
    %p157 = por %p155, %p156
    %p158 = scmp.ne.s32.totalorder %s150, %s153
    %p159 = scmp.eq.s32.totalorder %s20, 0
    %p160 = por %p158, %p159
    %p161 = scmp.ne.s32.totalorder %s150, %s153
    %p162 = scmp.eq.s32.totalorder %s25, 1
    %p163 = por %p161, %p162
    %p164 = scmp.ne.s32.totalorder %s153, %s154
    %p165 = scmp.eq.s32.totalorder %s25, 0
    %p166 = por %p164, %p165
    %p167 = scmp.ne.s32.totalorder %s153, %s154
    %p168 = scmp.eq.s32.totalorder %s26, 1
    %p169 = por %p167, %p168
    %p171 = scmp.ne.s32.totalorder %s154, %s170
    %p172 = scmp.eq.s32.totalorder %s26, 0
    %p173 = por %p171, %p172
    %s174 = ssub.s32 %s20, %s27
    %p175 = scmp.eq.s32.totalorder %s174, 0
    %s177 = sadd.s32 %s176, 1
    %s178 = scalar_select %p175, %s176, %s177
    %p181 = pneg %p175
    %p182 = scmp.eq.s32.totalorder %s20, 1
    %p183 = por %p181, %p182
    %p184 = scmp.ne.s32.totalorder %s176, %s179
    %p185 = scmp.eq.s32.totalorder %s20, 0
    %p186 = por %p184, %p185
    %p187 = scmp.ne.s32.totalorder %s176, %s179
    %p188 = scmp.eq.s32.totalorder %s25, 1
    %p189 = por %p187, %p188
    %p190 = scmp.ne.s32.totalorder %s179, %s180
    %p191 = scmp.eq.s32.totalorder %s25, 0
    %p192 = por %p190, %p191
    %p193 = scmp.ne.s32.totalorder %s179, %s180
    %p194 = scmp.eq.s32.totalorder %s26, 1
    %p195 = por %p193, %p194
    %p197 = scmp.ne.s32.totalorder %s180, %s196
    %p198 = scmp.eq.s32.totalorder %s26, 0
    %p199 = por %p197, %p198
    %s200 = ssub.s32 %s20, %s27
    %p201 = scmp.eq.s32.totalorder %s200, 0
    %s203 = sadd.s32 %s202, 1
    %s204 = scalar_select %p201, %s202, %s203
    %p207 = pneg %p201
    %p208 = scmp.eq.s32.totalorder %s20, 1
    %p209 = por %p207, %p208
    %p210 = scmp.ne.s32.totalorder %s202, %s205
    %p211 = scmp.eq.s32.totalorder %s20, 0
    %p212 = por %p210, %p211
    %p213 = scmp.ne.s32.totalorder %s202, %s205
    %p214 = scmp.eq.s32.totalorder %s25, 1
    %p215 = por %p213, %p214
    %p216 = scmp.ne.s32.totalorder %s205, %s206
    %p217 = scmp.eq.s32.totalorder %s25, 0
    %p218 = por %p216, %p217
    %p219 = scmp.ne.s32.totalorder %s205, %s206
    %p220 = scmp.eq.s32.totalorder %s26, 1
    %p221 = por %p219, %p220
    %p223 = scmp.ne.s32.totalorder %s206, %s222
    %p224 = scmp.eq.s32.totalorder %s26, 0
    %p225 = por %p223, %p224
    %s226 = ssub.s32 %s20, %s27
    %p227 = scmp.eq.s32.totalorder %s226, 0
    %s229 = sadd.s32 %s228, 1
    %s230 = scalar_select %p227, %s228, %s229
    %p233 = pneg %p227
    %p234 = scmp.eq.s32.totalorder %s20, 1
    %p235 = por %p233, %p234
    %p236 = scmp.ne.s32.totalorder %s228, %s231
    %p237 = scmp.eq.s32.totalorder %s20, 0
    %p238 = por %p236, %p237
    %p239 = scmp.ne.s32.totalorder %s228, %s231
    %p240 = scmp.eq.s32.totalorder %s25, 1
    %p241 = por %p239, %p240
    %p242 = scmp.ne.s32.totalorder %s231, %s232
    %p243 = scmp.eq.s32.totalorder %s25, 0
    %p244 = por %p242, %p243
    %p245 = scmp.ne.s32.totalorder %s231, %s232
    %p246 = scmp.eq.s32.totalorder %s26, 1
    %p247 = por %p245, %p246
    %p249 = scmp.ne.s32.totalorder %s232, %s248
    %p250 = scmp.eq.s32.totalorder %s26, 0
    %p251 = por %p249, %p250
    %s252 = ssub.s32 %s20, %s27
    %p253 = scmp.eq.s32.totalorder %s252, 0
    %s255 = sadd.s32 %s254, 1
    %s256 = scalar_select %p253, %s254, %s255
    %p259 = pneg %p253
    %p260 = scmp.eq.s32.totalorder %s20, 1
    %p261 = por %p259, %p260
    %p262 = scmp.ne.s32.totalorder %s254, %s257
    %p263 = scmp.eq.s32.totalorder %s20, 0
    %p264 = por %p262, %p263
    %p265 = scmp.ne.s32.totalorder %s254, %s257
    %p266 = scmp.eq.s32.totalorder %s25, 1
    %p267 = por %p265, %p266
    %p268 = scmp.ne.s32.totalorder %s257, %s258
    %p269 = scmp.eq.s32.totalorder %s25, 0
    %p270 = por %p268, %p269
    %p271 = scmp.ne.s32.totalorder %s257, %s258
    %p272 = scmp.eq.s32.totalorder %s26, 1
    %p273 = por %p271, %p272
    %p275 = scmp.ne.s32.totalorder %s258, %s274
    %p276 = scmp.eq.s32.totalorder %s26, 0
    %p277 = por %p275, %p276
    %s278 = ssub.s32 %s20, %s27
    %p279 = scmp.eq.s32.totalorder %s278, 0
    %s281 = sadd.s32 %s280, 1
    %s282 = scalar_select %p279, %s280, %s281
    %p285 = pneg %p279
    %p286 = scmp.eq.s32.totalorder %s20, 1
    %p287 = por %p285, %p286
    %p288 = scmp.ne.s32.totalorder %s280, %s283
    %p289 = scmp.eq.s32.totalorder %s20, 0
    %p290 = por %p288, %p289
    %p291 = scmp.ne.s32.totalorder %s280, %s283
    %p292 = scmp.eq.s32.totalorder %s25, 1
    %p293 = por %p291, %p292
    %p294 = scmp.ne.s32.totalorder %s283, %s284
    %p295 = scmp.eq.s32.totalorder %s25, 0
    %p296 = por %p294, %p295
    %p297 = scmp.ne.s32.totalorder %s283, %s284
    %p298 = scmp.eq.s32.totalorder %s26, 1
    %p299 = por %p297, %p298
    %p301 = scmp.ne.s32.totalorder %s284, %s300
    %p302 = scmp.eq.s32.totalorder %s26, 0
    %p303 = por %p301, %p302
    %s304 = ssub.s32 %s20, %s27
    %p305 = scmp.eq.s32.totalorder %s304, 0
    %s307 = sadd.s32 %s306, 1
    %s308 = scalar_select %p305, %s306, %s307
    %p311 = pneg %p305
    %p312 = scmp.eq.s32.totalorder %s20, 1
    %p313 = por %p311, %p312
    %p314 = scmp.ne.s32.totalorder %s306, %s309
    %p315 = scmp.eq.s32.totalorder %s20, 0
    %p316 = por %p314, %p315
    %p317 = scmp.ne.s32.totalorder %s306, %s309
    %p318 = scmp.eq.s32.totalorder %s25, 1
    %p319 = por %p317, %p318
    %p320 = scmp.ne.s32.totalorder %s309, %s310
    %p321 = scmp.eq.s32.totalorder %s25, 0
    %p322 = por %p320, %p321
    %p323 = scmp.ne.s32.totalorder %s309, %s310
    %p324 = scmp.eq.s32.totalorder %s26, 1
    %p325 = por %p323, %p324
    %p327 = scmp.ne.s32.totalorder %s310, %s326
    %p328 = scmp.eq.s32.totalorder %s26, 0
    %p329 = por %p327, %p328
    %s330 = ssub.s32 %s20, %s27
    %p331 = scmp.eq.s32.totalorder %s330, 0
    %s333 = sadd.s32 %s332, 1
    %s334 = scalar_select %p331, %s332, %s333
    %p337 = pneg %p331
    %p338 = scmp.eq.s32.totalorder %s20, 1
    %p339 = por %p337, %p338
    %p340 = scmp.ne.s32.totalorder %s332, %s335
    %p341 = scmp.eq.s32.totalorder %s20, 0
    %p342 = por %p340, %p341
    %p343 = scmp.ne.s32.totalorder %s332, %s335
    %p344 = scmp.eq.s32.totalorder %s25, 1
    %p345 = por %p343, %p344
    %p346 = scmp.ne.s32.totalorder %s335, %s336
    %p347 = scmp.eq.s32.totalorder %s25, 0
    %p348 = por %p346, %p347
    %p349 = scmp.ne.s32.totalorder %s335, %s336
    %p350 = scmp.eq.s32.totalorder %s26, 1
    %p351 = por %p349, %p350
    %p353 = scmp.ne.s32.totalorder %s336, %s352
    %p354 = scmp.eq.s32.totalorder %s26, 0
    %p355 = por %p353, %p354
    %s356 = ssub.s32 %s20, %s27
    %p357 = scmp.eq.s32.totalorder %s356, 0
    %s359 = sadd.s32 %s358, 1
    %s360 = scalar_select %p357, %s358, %s359
    %p363 = pneg %p357
    %p364 = scmp.eq.s32.totalorder %s20, 1
    %p365 = por %p363, %p364
    %p366 = scmp.ne.s32.totalorder %s358, %s361
    %p367 = scmp.eq.s32.totalorder %s20, 0
    %p368 = por %p366, %p367
    %p369 = scmp.ne.s32.totalorder %s358, %s361
    %p370 = scmp.eq.s32.totalorder %s25, 1
    %p371 = por %p369, %p370
    %p372 = scmp.ne.s32.totalorder %s361, %s362
    %p373 = scmp.eq.s32.totalorder %s25, 0
    %p374 = por %p372, %p373
    %p375 = scmp.ne.s32.totalorder %s361, %s362
    %p376 = scmp.eq.s32.totalorder %s26, 1
    %p377 = por %p375, %p376
    %p379 = scmp.ne.s32.totalorder %s362, %s378
    %p380 = scmp.eq.s32.totalorder %s26, 0
    %p381 = por %p379, %p380
    %s383 = sadd.s32 %s382, 1
    %p386 = scmp.eq.s32.totalorder %s20, 1
    %p387 = scmp.ne.s32.totalorder %s382, %s384
    %p388 = scmp.eq.s32.totalorder %s20, 0
    %p389 = por %p387, %p388
    %p390 = scmp.ne.s32.totalorder %s382, %s384
    %p391 = scmp.eq.s32.totalorder %s25, 1
    %p392 = por %p390, %p391
    %p393 = scmp.ne.s32.totalorder %s384, %s385
    %p394 = scmp.eq.s32.totalorder %s25, 0
    %p395 = por %p393, %p394
    %p396 = scmp.ne.s32.totalorder %s384, %s385
    %p397 = scmp.eq.s32.totalorder %s26, 1
    %p398 = por %p396, %p397
    %p400 = scmp.ne.s32.totalorder %s385, %s399
    %p401 = scmp.eq.s32.totalorder %s26, 0
    %p402 = por %p400, %p401
    %p403 = scmp.le.s32.totalorder 1, %s20
    %p404 = scmp.lt.s32.totalorder %s20, 3
    %p405 = pnand %p403, %p404
    %p406 = pneg %p405
    // Predicated region
    $region9: #{gpt_forward.2} parent=5 // pred_check
      _
    $region10: #{gpt_forward.2} parent=5 // pred_check_branch
      %408 = sbr.rel (%p405) target = $region12
    $region11: #{gpt_forward.2} parent=5 // pred_region
      %s409 = ssub.s32 %s20, 1
      // Predicated region
      $region13: #{gpt_forward.2} parent=11 // pred_check
        %p410 = pneg %p41
      $region14: #{gpt_forward.2} parent=11 // pred_check_branch
        %412 = sbr.rel (%p410) target = $region16
      $region15: #{gpt_forward.2} parent=11 // pred_region
        _
      $region16: #{gpt_forward.2} parent=11 // pred_fallthru
        _
      // Predicated region
      $region17: #{gpt_forward.2} parent=11 // pred_check
        %p413 = pneg %p62
      $region18: #{gpt_forward.2} parent=11 // pred_check_branch
        %415 = sbr.rel (%p413) target = $region20
      $region19: #{gpt_forward.2} parent=11 // pred_region
        _
      $region20: #{gpt_forward.2} parent=11 // pred_fallthru
        _
    $region12: #{gpt_forward.2} parent=5 // pred_fallthru
      _
    %p416 = scmp.lt.s32.totalorder %s20, 2
    // Predicated region
    $region21: #{gpt_forward.2} parent=5 // pred_check
      %p417 = pneg %p416
    $region22: #{gpt_forward.2} parent=5 // pred_check_branch
      %419 = sbr.rel (%p417) target = $region24
    $region23: #{gpt_forward.2} parent=5 // pred_region
      // Predicated region
      $region25: #{gpt_forward.2} parent=23 // pred_check
        %p420 = pneg %p82
      $region26: #{gpt_forward.2} parent=23 // pred_check_branch
        %422 = sbr.rel (%p420) target = $region28
      $region27: #{gpt_forward.2} parent=23 // pred_region
        %p423 = scmp.lt.s32.totalorder %s20, 1
        %s424 = scalar_select %p423, %s20, 1
        %s425 = smul.addr %s424, 4
        %s426 = smul.addr %s425, 4
        %s427 = scalar_lea.vmem %s2, %s426
      $region28: #{gpt_forward.2} parent=23 // pred_fallthru
        _
      // Predicated region
      $region29: #{gpt_forward.2} parent=23 // pred_check
        %p428 = pneg %p108
      $region30: #{gpt_forward.2} parent=23 // pred_check_branch
        %430 = sbr.rel (%p428) target = $region32
      $region31: #{gpt_forward.2} parent=23 // pred_region
        %p431 = scmp.lt.s32.totalorder %s20, 1
        %s432 = scalar_select %p431, %s20, 1
        %s433 = scalar_lea.vmem %s3, %s432
      $region32: #{gpt_forward.2} parent=23 // pred_fallthru
        _
      // Predicated region
      $region33: #{gpt_forward.2} parent=23 // pred_check
        %p434 = pneg %p134
      $region34: #{gpt_forward.2} parent=23 // pred_check_branch
        %436 = sbr.rel (%p434) target = $region36
      $region35: #{gpt_forward.2} parent=23 // pred_region
        %p437 = scmp.lt.s32.totalorder %s20, 1
        %s438 = scalar_select %p437, %s20, 1
        %s439 = smul.addr %s438, 4
        %s440 = smul.addr %s439, 4
        %s441 = scalar_lea.vmem %s4, %s440
      $region36: #{gpt_forward.2} parent=23 // pred_fallthru
        _
      // Predicated region
      $region37: #{gpt_forward.2} parent=23 // pred_check
        %p442 = pneg %p160
      $region38: #{gpt_forward.2} parent=23 // pred_check_branch
        %444 = sbr.rel (%p442) target = $region40
      $region39: #{gpt_forward.2} parent=23 // pred_region
        %p445 = scmp.lt.s32.totalorder %s20, 1
        %s446 = scalar_select %p445, %s20, 1
        %s447 = scalar_lea.vmem %s5, %s446
      $region40: #{gpt_forward.2} parent=23 // pred_fallthru
        _
      // Predicated region
      $region41: #{gpt_forward.2} parent=23 // pred_check
        %p448 = pneg %p186
      $region42: #{gpt_forward.2} parent=23 // pred_check_branch
        %450 = sbr.rel (%p448) target = $region44
      $region43: #{gpt_forward.2} parent=23 // pred_region
        %p451 = scmp.lt.s32.totalorder %s20, 1
        %s452 = scalar_select %p451, %s20, 1
        %s453 = scalar_lea.vmem %s6, %s452
      $region44: #{gpt_forward.2} parent=23 // pred_fallthru
        _
      // Predicated region
      $region45: #{gpt_forward.2} parent=23 // pred_check
        %p454 = pneg %p212
      $region46: #{gpt_forward.2} parent=23 // pred_check_branch
        %456 = sbr.rel (%p454) target = $region48
      $region47: #{gpt_forward.2} parent=23 // pred_region
        %p457 = scmp.lt.s32.totalorder %s20, 1
        %s458 = scalar_select %p457, %s20, 1
        %s459 = scalar_lea.vmem %s7, %s458
      $region48: #{gpt_forward.2} parent=23 // pred_fallthru
        _
      // Predicated region
      $region49: #{gpt_forward.2} parent=23 // pred_check
        %p460 = pneg %p238
      $region50: #{gpt_forward.2} parent=23 // pred_check_branch
        %462 = sbr.rel (%p460) target = $region52
      $region51: #{gpt_forward.2} parent=23 // pred_region
        %p463 = scmp.lt.s32.totalorder %s20, 1
        %s464 = scalar_select %p463, %s20, 1
        %s465 = smul.addr %s464, 4
        %s466 = smul.addr %s465, 4
        %s467 = scalar_lea.vmem %s8, %s466
      $region52: #{gpt_forward.2} parent=23 // pred_fallthru
        _
      // Predicated region
      $region53: #{gpt_forward.2} parent=23 // pred_check
        %p468 = pneg %p264
      $region54: #{gpt_forward.2} parent=23 // pred_check_branch
        %470 = sbr.rel (%p468) target = $region56
      $region55: #{gpt_forward.2} parent=23 // pred_region
        %p471 = scmp.lt.s32.totalorder %s20, 1
        %s472 = scalar_select %p471, %s20, 1
        %s473 = scalar_lea.vmem %s9, %s472
      $region56: #{gpt_forward.2} parent=23 // pred_fallthru
        _
      // Predicated region
      $region57: #{gpt_forward.2} parent=23 // pred_check
        %p474 = pneg %p290
      $region58: #{gpt_forward.2} parent=23 // pred_check_branch
        %476 = sbr.rel (%p474) target = $region60
      $region59: #{gpt_forward.2} parent=23 // pred_region
        %p477 = scmp.lt.s32.totalorder %s20, 1
        %s478 = scalar_select %p477, %s20, 1
        %s479 = smul.addr %s478, 8
        %s480 = smul.addr %s479, 4
        %s481 = scalar_lea.vmem %s10, %s480
      $region60: #{gpt_forward.2} parent=23 // pred_fallthru
        _
      // Predicated region
      $region61: #{gpt_forward.2} parent=23 // pred_check
        %p482 = pneg %p316
      $region62: #{gpt_forward.2} parent=23 // pred_check_branch
        %484 = sbr.rel (%p482) target = $region64
      $region63: #{gpt_forward.2} parent=23 // pred_region
        %p485 = scmp.lt.s32.totalorder %s20, 1
        %s486 = scalar_select %p485, %s20, 1
        %s487 = scalar_lea.vmem %s11, %s486
      $region64: #{gpt_forward.2} parent=23 // pred_fallthru
        _
      // Predicated region
      $region65: #{gpt_forward.2} parent=23 // pred_check
        %p488 = pneg %p342
      $region66: #{gpt_forward.2} parent=23 // pred_check_branch
        %490 = sbr.rel (%p488) target = $region68
      $region67: #{gpt_forward.2} parent=23 // pred_region
        %p491 = scmp.lt.s32.totalorder %s20, 1
        %s492 = scalar_select %p491, %s20, 1
        %s493 = scalar_lea.vmem %s12, %s492
      $region68: #{gpt_forward.2} parent=23 // pred_fallthru
        _
      // Predicated region
      $region69: #{gpt_forward.2} parent=23 // pred_check
        %p494 = pneg %p368
      $region70: #{gpt_forward.2} parent=23 // pred_check_branch
        %496 = sbr.rel (%p494) target = $region72
      $region71: #{gpt_forward.2} parent=23 // pred_region
        %p497 = scmp.lt.s32.totalorder %s20, 1
        %s498 = scalar_select %p497, %s20, 1
        %s499 = scalar_lea.vmem %s13, %s498
      $region72: #{gpt_forward.2} parent=23 // pred_fallthru
        _
    $region24: #{gpt_forward.2} parent=5 // pred_fallthru
      _
    %p500 = scmp.le.s32.totalorder 1, %s20
    %p501 = scmp.lt.s32.totalorder %s20, 3
    %p502 = pnand %p500, %p501
    %p503 = pneg %p502
    // Predicated region
    $region73: #{gpt_forward.2} parent=5 // pred_check
      _
    $region74: #{gpt_forward.2} parent=5 // pred_check_branch
      %505 = sbr.rel (%p502) target = $region76
    $region75: #{gpt_forward.2} parent=5 // pred_region
      %s506 = ssub.s32 %s20, 1
      %p507 = pneg %p41
      %p508 = pneg %p38
      %p509 = pneg %p62
      %p510 = pneg %p59
      %p511 = scmp.lt.s32.totalorder %s25, 1
      %s512 = scalar_select %p511, %s25, 1
      %s513 = smul.addr %s512, 4
      %s514 = smul.addr %s513, 4
      %s515 = scalar_lea.vmem %s2, %s514
      %p516 = pneg %p88
      %p517 = pneg %p85
      %p518 = scmp.lt.s32.totalorder %s25, 1
      %s519 = scalar_select %p518, %s25, 1
      %s520 = scalar_lea.vmem %s3, %s519
      %p521 = pneg %p114
      %p522 = pneg %p111
      %p523 = scmp.lt.s32.totalorder %s25, 1
      %s524 = scalar_select %p523, %s25, 1
      %s525 = smul.addr %s524, 4
      %s526 = smul.addr %s525, 4
      %s527 = scalar_lea.vmem %s4, %s526
      %p528 = pneg %p140
      %p529 = pneg %p137
      %p530 = scmp.lt.s32.totalorder %s25, 1
      %s531 = scalar_select %p530, %s25, 1
      %s532 = scalar_lea.vmem %s5, %s531
      %p533 = pneg %p166
      %p534 = pneg %p163
      %p535 = scmp.lt.s32.totalorder %s25, 1
      %s536 = scalar_select %p535, %s25, 1
      %s537 = scalar_lea.vmem %s6, %s536
      %p538 = pneg %p192
      %p539 = pneg %p189
      %p540 = scmp.lt.s32.totalorder %s25, 1
      %s541 = scalar_select %p540, %s25, 1
      %s542 = scalar_lea.vmem %s7, %s541
      %p543 = pneg %p218
      %p544 = pneg %p215
      %p545 = scmp.lt.s32.totalorder %s25, 1
      %s546 = scalar_select %p545, %s25, 1
      %s547 = smul.addr %s546, 4
      %s548 = smul.addr %s547, 4
      %s549 = scalar_lea.vmem %s8, %s548
      %p550 = pneg %p244
      %p551 = pneg %p241
      %p552 = scmp.lt.s32.totalorder %s25, 1
      %s553 = scalar_select %p552, %s25, 1
      %s554 = scalar_lea.vmem %s9, %s553
      %p555 = pneg %p270
      %p556 = pneg %p267
      %p557 = scmp.lt.s32.totalorder %s25, 1
      %s558 = scalar_select %p557, %s25, 1
      %s559 = smul.addr %s558, 8
      %s560 = smul.addr %s559, 4
      %s561 = scalar_lea.vmem %s10, %s560
      %p562 = pneg %p296
      %p563 = pneg %p293
      %p564 = scmp.lt.s32.totalorder %s25, 1
      %s565 = scalar_select %p564, %s25, 1
      %s566 = scalar_lea.vmem %s11, %s565
      %p567 = pneg %p322
      %p568 = pneg %p319
      %p569 = scmp.lt.s32.totalorder %s25, 1
      %s570 = scalar_select %p569, %s25, 1
      %s571 = scalar_lea.vmem %s12, %s570
      %p572 = pneg %p348
      %p573 = pneg %p345
      %p574 = scmp.lt.s32.totalorder %s25, 1
      %s575 = scalar_select %p574, %s25, 1
      %s576 = scalar_lea.vmem %s13, %s575
      %p577 = pneg %p374
      %p578 = pneg %p371
      %p579 = pneg %p395
      %p580 = pneg %p392
      %p581 = scmp.lt.s32.totalorder %s25, 1
      %s582 = scalar_select %p581, %s25, 1
      %s583 = smul.addr %s582, 4
      %s584 = smul.addr %s583, 4
      %s585 = scalar_lea.vmem %s2, %s584
      %p586 = scmp.lt.s32.totalorder %s25, 1
      %s587 = scalar_select %p586, %s25, 1
      %s588 = scalar_lea.vmem %s3, %s587
      %p589 = scmp.lt.s32.totalorder %s25, 1
      %s590 = scalar_select %p589, %s25, 1
      %s591 = smul.addr %s590, 4
      %s592 = smul.addr %s591, 4
      %s593 = scalar_lea.vmem %s4, %s592
      %p594 = scmp.lt.s32.totalorder %s25, 1
      %s595 = scalar_select %p594, %s25, 1
      %s596 = scalar_lea.vmem %s5, %s595
      %p597 = scmp.lt.s32.totalorder %s25, 1
      %s598 = scalar_select %p597, %s25, 1
      %s599 = scalar_lea.vmem %s6, %s598
      %p600 = scmp.lt.s32.totalorder %s25, 1
      %s601 = scalar_select %p600, %s25, 1
      %s602 = scalar_lea.vmem %s7, %s601
      %p603 = scmp.lt.s32.totalorder %s25, 1
      %s604 = scalar_select %p603, %s25, 1
      %s605 = smul.addr %s604, 4
      %s606 = smul.addr %s605, 4
      %s607 = scalar_lea.vmem %s8, %s606
      %p608 = scmp.lt.s32.totalorder %s25, 1
      %s609 = scalar_select %p608, %s25, 1
      %s610 = scalar_lea.vmem %s9, %s609
      %p611 = scmp.lt.s32.totalorder %s25, 1
      %s612 = scalar_select %p611, %s25, 1
      %s613 = smul.addr %s612, 8
      %s614 = smul.addr %s613, 4
      %s615 = scalar_lea.vmem %s10, %s614
      %p616 = scmp.lt.s32.totalorder %s25, 1
      %s617 = scalar_select %p616, %s25, 1
      %s618 = scalar_lea.vmem %s11, %s617
      %p619 = scmp.lt.s32.totalorder %s25, 1
      %s620 = scalar_select %p619, %s25, 1
      %s621 = scalar_lea.vmem %s12, %s620
      %p622 = scmp.lt.s32.totalorder %s25, 1
      %s623 = scalar_select %p622, %s25, 1
      %s624 = scalar_lea.vmem %s13, %s623
      %p626 = scmp.eq.s32.totalorder %s25, 0
      // Predicated region
      $region77: #{gpt_forward.2} parent=75 // pred_check
        %p627 = pneg %p626
      $region78: #{gpt_forward.2} parent=75 // pred_check_branch
        %629 = sbr.rel (%p627) target = $region80
      $region79: #{gpt_forward.2} parent=75 // pred_region
        %v630 = vld [vmem:[%s0] sm:$0xff]
        %v631 = vld [vmem:[%s0 + $0x8] sm:$0xff]
        %vm632 = vcmask 261120
        %633 = vst.msk [vmem:[#allocation2] sm:$0xff] %vm632, %v630
        %634 = vst.msk [vmem:[#allocation2 + $0x8] sm:$0xff] %vm632, %v631
      $region80: #{gpt_forward.2} parent=75 // pred_fallthru
        _
      %v635 = vld [vmem:[#allocation2] sm:$0xff]
      %v636 = vld [vmem:[#allocation2 + $0x8] sm:$0xff]
      %v637 = vpack.c.bf16 %v636, %v635
      %v638 = vld [vmem:[%s585] sm:$0xf]
      %v639 = vld [vmem:[%s585 + $0x4] sm:$0xf]
      %v640 = vld [vmem:[%s585 + $0x8] sm:$0xf]
      %v641 = vld [vmem:[%s585 + $0xc] sm:$0xf]
      %v642 = vld [vmem:[%s588] sm:$0x1]
      %v644 = vlaneseq
      %v645 = vshrl.u32 %v644, 7
      %v646 = vsub.s32 0, %v645
      %v647 = vrot.slane %v642, %v646
      %v653 = vunpack.c.l.b16 %v638
      %v654 = vunpack.c.l.b16 %v639
      %v655 = vunpack.c.l.b16 %v640
      %v656 = vunpack.c.l.b16 %v641
      %v657 = vpack.c.b16 %v654, %v653
      %v658 = vpack.c.b16 %v656, %v655
      %vm661 = vcmask 261120
      %v663 = vsel %vm661, %v637, 0
      %665 = vmatprep.subr.bf16.mxu0 0
      %666 = vmatpush1.bf16.msra.mxu0 %v657
      %667 = vmatprep.subr.bf16.mxu0 0
      %668 = vmatpush1.bf16.msra.mxu0 %v658
      %669 = vmatprep.subr.bf16.mxu0 0
      %670 = vmatpush1.bf16.msra.mxu0 0
      %671 = vmatprep.subr.bf16.mxu0 0
      %672 = vmatpush1.bf16.msra.mxu0 0
      %673 = vmatprep.subr.bf16.mxu0 0
      %674 = vmatpush1.bf16.msra.mxu0 0
      %675 = vmatprep.subr.bf16.mxu0 0
      %676 = vmatpush1.bf16.msra.mxu0 0
      %677 = vmatprep.subr.bf16.mxu0 0
      %678 = vmatpush1.bf16.msra.mxu0 0
      %679 = vmatprep.subr.bf16.mxu0 0
      %680 = vmatpush1.bf16.msra.mxu0 0
      %681 = vmatprep.subr.bf16.mxu0 0
      %682 = vmatpush1.bf16.msra.mxu0 0
      %683 = vmatprep.subr.bf16.mxu0 0
      %684 = vmatpush1.bf16.msra.mxu0 0
      %685 = vmatprep.subr.bf16.mxu0 0
      %686 = vmatpush1.bf16.msra.mxu0 0
      %687 = vmatprep.subr.bf16.mxu0 0
      %688 = vmatpush1.bf16.msra.mxu0 0
      %689 = vmatprep.subr.bf16.mxu0 0
      %690 = vmatpush1.bf16.msra.mxu0 0
      %691 = vmatprep.subr.bf16.mxu0 0
      %692 = vmatpush1.bf16.msra.mxu0 0
      %693 = vmatprep.subr.bf16.mxu0 0
      %694 = vmatpush1.bf16.msra.mxu0 0
      %695 = vmatprep.subr.bf16.mxu0 0
      %696 = vmatpush1.bf16.msra.mxu0 0
      %697 = vmatprep.mubr.bf16.mxu0 0
      %698 = vmatmul.mubr.bf16.gmra.mrb[0].mxu0 %v663
      %v699 = vpop.f32.mrb[0].mxu0
      %v700 = vadd.f32 %v647, %v699
      %v701 = vpop.f32.mrb[0].mxu0
      %v702 = vpop.f32.mrb[0].mxu0
      %v703 = vadd.f32 %v647, %v702
      %v704 = vpop.f32.mrb[0].mxu0
      %705 = vdwg.mxu0
      %v706 = vlaneseq
      %v707 = vshrl.u32 %v706, 7
      %v708 = vlaneseq
      %v709 = vand.u32 %v708, 127
      %vm710 = vcmp.gt.s32.totalorder %v709, %v707
      %v711 = vsel %vm710, -1e+09, 0.0
      %v712 = vld [vmem:[%s1] sm:$0x3]
      %v715 = vunpack.c.l.s4 1966171168
      %v716 = vunpack.c.0.s8 %v715
      %v717 = vlaneseq
      %v718 = vshrl.u32 %v717, 7
      %v719 = vsub.s32 %v716, %v718
      %v720 = vrot.slane %v712, %v719
      %v721 = vcombine.high %v720, %v720
      %v723 = vunpack.c.l.s4 1966171168
      %v724 = vunpack.c.0.s8 %v723
      %v725 = vlaneseq
      %v726 = vshrl.u32 %v725, 7
      %v727 = vsub.s32 %v724, %v726
      %v728 = vrot.slane %v720, %v727
      %v730 = vunpack.c.l.s4 1966171168
      %v731 = vunpack.c.0.s8 %v730
      %v732 = vlaneseq
      %v733 = vshrl.u32 %v732, 7
      %v734 = vsub.s32 %v731, %v733
      %v735 = vrot.slane %v721, %v734
      %v736 = vlaneseq
      %v737 = vshrl.u32 %v736, 7
      %v738 = vsub.s32 0, %v737
      %v739 = vrot.slane %v728, %v738
      %v740 = vlaneseq
      %v741 = vshrl.u32 %v740, 7
      %v742 = vsub.s32 0, %v741
      %v743 = vrot.slane %v735, %v742
      %v746 = vadd.f32 %v711, %v739
      %v747 = vadd.f32 %v711, %v743
      %v748 = vpack.c.bf16 %v700, %v700
      %v749 = vpack.c.bf16 %v703, %v703
      %751 = vrot.lane.b32.xlu0 %v748, 96
      %v752 = vpop.permute.xlu0 %751
      %vm753 = vcmask 130048
      %v755 = vsel %vm753, %v748, 0
      %v758 = vsel %vm753, %v752, 0
      %760 = vmatprep.subr.bf16.mxu0 0
      %761 = vmatpush1.bf16.xpose.msra.mxu0 %v758
      %762 = vmatprep.subr.bf16.mxu0 0
      %763 = vmatpush1.bf16.xpose.msra.mxu0 0
      %764 = vmatprep.subr.bf16.mxu0 0
      %765 = vmatpush1.bf16.xpose.msra.mxu0 0
      %766 = vmatprep.subr.bf16.mxu0 0
      %767 = vmatpush1.bf16.xpose.msra.mxu0 0
      %768 = vmatprep.subr.bf16.mxu0 0
      %769 = vmatpush1.bf16.xpose.msra.mxu0 0
      %770 = vmatprep.subr.bf16.mxu0 0
      %771 = vmatpush1.bf16.xpose.msra.mxu0 0
      %772 = vmatprep.subr.bf16.mxu0 0
      %773 = vmatpush1.bf16.xpose.msra.mxu0 0
      %774 = vmatprep.subr.bf16.mxu0 0
      %775 = vmatpush1.bf16.xpose.msra.mxu0 0
      %776 = vmatprep.subr.bf16.mxu0 0
      %777 = vmatpush1.bf16.xpose.msra.mxu0 0
      %778 = vmatprep.subr.bf16.mxu0 0
      %779 = vmatpush1.bf16.xpose.msra.mxu0 0
      %780 = vmatprep.subr.bf16.mxu0 0
      %781 = vmatpush1.bf16.xpose.msra.mxu0 0
      %782 = vmatprep.subr.bf16.mxu0 0
      %783 = vmatpush1.bf16.xpose.msra.mxu0 0
      %784 = vmatprep.subr.bf16.mxu0 0
      %785 = vmatpush1.bf16.xpose.msra.mxu0 0
      %786 = vmatprep.subr.bf16.mxu0 0
      %787 = vmatpush1.bf16.xpose.msra.mxu0 0
      %788 = vmatprep.subr.bf16.mxu0 0
      %789 = vmatpush1.bf16.xpose.msra.mxu0 0
      %790 = vmatprep.subr.bf16.mxu0 0
      %791 = vmatpush1.bf16.xpose.msra.mxu0 0
      %792 = vmatprep.mubr.bf16.mxu0 0
      %793 = vmatmul.mubr.bf16.gmra.mrb[0].mxu0 %v755
      %v794 = vpop.f32.mrb[0].mxu0
      %v795 = vadd.f32 %v746, %v794
      %v796 = vpop.f32.mrb[0].mxu0
      %v797 = vpop.f32.mrb[0].mxu0
      %v798 = vpop.f32.mrb[0].mxu0
      %799 = vdwg.mxu0
      %801 = vrot.lane.b32.xlu0 %v749, 96
      %v802 = vpop.permute.xlu0 %801
      %v804 = vsel %vm753, %v749, 0
      %v807 = vsel %vm753, %v802, 0
      %809 = vmatprep.subr.bf16.mxu0 0
      %810 = vmatpush1.bf16.xpose.msra.mxu0 %v807
      %811 = vmatprep.subr.bf16.mxu0 0
      %812 = vmatpush1.bf16.xpose.msra.mxu0 0
      %813 = vmatprep.subr.bf16.mxu0 0
      %814 = vmatpush1.bf16.xpose.msra.mxu0 0
      %815 = vmatprep.subr.bf16.mxu0 0
      %816 = vmatpush1.bf16.xpose.msra.mxu0 0
      %817 = vmatprep.subr.bf16.mxu0 0
      %818 = vmatpush1.bf16.xpose.msra.mxu0 0
      %819 = vmatprep.subr.bf16.mxu0 0
      %820 = vmatpush1.bf16.xpose.msra.mxu0 0
      %821 = vmatprep.subr.bf16.mxu0 0
      %822 = vmatpush1.bf16.xpose.msra.mxu0 0
      %823 = vmatprep.subr.bf16.mxu0 0
      %824 = vmatpush1.bf16.xpose.msra.mxu0 0
      %825 = vmatprep.subr.bf16.mxu0 0
      %826 = vmatpush1.bf16.xpose.msra.mxu0 0
      %827 = vmatprep.subr.bf16.mxu0 0
      %828 = vmatpush1.bf16.xpose.msra.mxu0 0
      %829 = vmatprep.subr.bf16.mxu0 0
      %830 = vmatpush1.bf16.xpose.msra.mxu0 0
      %831 = vmatprep.subr.bf16.mxu0 0
      %832 = vmatpush1.bf16.xpose.msra.mxu0 0
      %833 = vmatprep.subr.bf16.mxu0 0
      %834 = vmatpush1.bf16.xpose.msra.mxu0 0
      %835 = vmatprep.subr.bf16.mxu0 0
      %836 = vmatpush1.bf16.xpose.msra.mxu0 0
      %837 = vmatprep.subr.bf16.mxu0 0
      %838 = vmatpush1.bf16.xpose.msra.mxu0 0
      %839 = vmatprep.subr.bf16.mxu0 0
      %840 = vmatpush1.bf16.xpose.msra.mxu0 0
      %841 = vmatprep.mubr.bf16.mxu0 0
      %842 = vmatmul.mubr.bf16.gmra.mrb[0].mxu0 %v804
      %v843 = vpop.f32.mrb[0].mxu0
      %v844 = vadd.f32 %v747, %v843
      %v845 = vpop.f32.mrb[0].mxu0
      %v846 = vpop.f32.mrb[0].mxu0
      %v847 = vpop.f32.mrb[0].mxu0
      %848 = vdwg.mxu0
      %vm849 = vcmask 64512
      %v850 = vsel %vm849, %v795, -inf
      %851 = vmax.xlane.f32.xlu0 %v850
      %v852 = vpop.xlane.xlu0 %851
      %v853 = vsel %vm849, %v844, -inf
      %854 = vmax.xlane.f32.xlu0 %v853
      %v855 = vpop.xlane.xlu0 %854
      %v856 = vsub.f32 %v795, %v852
      %v857 = vsub.f32 %v844, %v855
      %v858 = vmul.f32 %v856, 1.442695
      %v859 = vpow.pop %v858
      %v860 = vmul.f32 %v857, 1.442695
      %v861 = vpow.pop %v860
      %v862 = vsel %vm849, %v859, 0.0
      %863 = vadd.xlane.f32.xlu0 %v862
      %v864 = vpop.xlane.xlu0 %863
      %v865 = vsel %vm849, %v861, 0.0
      %866 = vadd.xlane.f32.xlu0 %v865
      %v867 = vpop.xlane.xlu0 %866
      %v868 = vrcp.pop %v864
      %v869 = vrcp.pop %v867
      %v870 = vmul.f32 %v859, %v868
      %v871 = vmul.f32 %v861, %v869
      %v872 = vpack.c.bf16 %v870, %v870
      %v873 = vpack.c.bf16 %v871, %v871
      %874 = vrot.lane.b32.xlu0 %v748, 64
      %v875 = vpop.permute.xlu0 %874
      %v877 = vsel %vm849, %v872, 0
      %vm879 = vcmask 1043456
      %v881 = vsel %vm879, %v875, 0
      %883 = vmatprep.subr.bf16.mxu0 0
      %884 = vmatpush1.bf16.msra.mxu0 %v881
      %885 = vmatprep.subr.bf16.mxu0 0
      %886 = vmatpush1.bf16.msra.mxu0 0
      %887 = vmatprep.subr.bf16.mxu0 0
      %888 = vmatpush1.bf16.msra.mxu0 0
      %889 = vmatprep.subr.bf16.mxu0 0
      %890 = vmatpush1.bf16.msra.mxu0 0
      %891 = vmatprep.subr.bf16.mxu0 0
      %892 = vmatpush1.bf16.msra.mxu0 0
      %893 = vmatprep.subr.bf16.mxu0 0
      %894 = vmatpush1.bf16.msra.mxu0 0
      %895 = vmatprep.subr.bf16.mxu0 0
      %896 = vmatpush1.bf16.msra.mxu0 0
      %897 = vmatprep.subr.bf16.mxu0 0
      %898 = vmatpush1.bf16.msra.mxu0 0
      %899 = vmatprep.subr.bf16.mxu0 0
      %900 = vmatpush1.bf16.msra.mxu0 0
      %901 = vmatprep.subr.bf16.mxu0 0
      %902 = vmatpush1.bf16.msra.mxu0 0
      %903 = vmatprep.subr.bf16.mxu0 0
      %904 = vmatpush1.bf16.msra.mxu0 0
      %905 = vmatprep.subr.bf16.mxu0 0
      %906 = vmatpush1.bf16.msra.mxu0 0
      %907 = vmatprep.subr.bf16.mxu0 0
      %908 = vmatpush1.bf16.msra.mxu0 0
      %909 = vmatprep.subr.bf16.mxu0 0
      %910 = vmatpush1.bf16.msra.mxu0 0
      %911 = vmatprep.subr.bf16.mxu0 0
      %912 = vmatpush1.bf16.msra.mxu0 0
      %913 = vmatprep.subr.bf16.mxu0 0
      %914 = vmatpush1.bf16.msra.mxu0 0
      %915 = vmatprep.mubr.bf16.mxu0 0
      %916 = vmatmul.mubr.bf16.gmra.mrb[0].mxu0 %v877
      %v917 = vpop.f32.mrb[0].mxu0
      %v918 = vadd.f32 0.0, %v917
      %v919 = vpop.f32.mrb[0].mxu0
      %v920 = vpop.f32.mrb[0].mxu0
      %v921 = vpop.f32.mrb[0].mxu0
      %922 = vdwg.mxu0
      %923 = vrot.lane.b32.xlu0 %v749, 64
      %v924 = vpop.permute.xlu0 %923
      %v926 = vsel %vm849, %v873, 0
      %v929 = vsel %vm879, %v924, 0
      %931 = vmatprep.subr.bf16.mxu0 0
      %932 = vmatpush1.bf16.msra.mxu0 %v929
      %933 = vmatprep.subr.bf16.mxu0 0
      %934 = vmatpush1.bf16.msra.mxu0 0
      %935 = vmatprep.subr.bf16.mxu0 0
      %936 = vmatpush1.bf16.msra.mxu0 0
      %937 = vmatprep.subr.bf16.mxu0 0
      %938 = vmatpush1.bf16.msra.mxu0 0
      %939 = vmatprep.subr.bf16.mxu0 0
      %940 = vmatpush1.bf16.msra.mxu0 0
      %941 = vmatprep.subr.bf16.mxu0 0
      %942 = vmatpush1.bf16.msra.mxu0 0
      %943 = vmatprep.subr.bf16.mxu0 0
      %944 = vmatpush1.bf16.msra.mxu0 0
      %945 = vmatprep.subr.bf16.mxu0 0
      %946 = vmatpush1.bf16.msra.mxu0 0
      %947 = vmatprep.subr.bf16.mxu0 0
      %948 = vmatpush1.bf16.msra.mxu0 0
      %949 = vmatprep.subr.bf16.mxu0 0
      %950 = vmatpush1.bf16.msra.mxu0 0
      %951 = vmatprep.subr.bf16.mxu0 0
      %952 = vmatpush1.bf16.msra.mxu0 0
      %953 = vmatprep.subr.bf16.mxu0 0
      %954 = vmatpush1.bf16.msra.mxu0 0
      %955 = vmatprep.subr.bf16.mxu0 0
      %956 = vmatpush1.bf16.msra.mxu0 0
      %957 = vmatprep.subr.bf16.mxu0 0
      %958 = vmatpush1.bf16.msra.mxu0 0
      %959 = vmatprep.subr.bf16.mxu0 0
      %960 = vmatpush1.bf16.msra.mxu0 0
      %961 = vmatprep.subr.bf16.mxu0 0
      %962 = vmatpush1.bf16.msra.mxu0 0
      %963 = vmatprep.mubr.bf16.mxu0 0
      %964 = vmatmul.mubr.bf16.gmra.mrb[0].mxu0 %v926
      %v965 = vpop.f32.mrb[0].mxu0
      %v966 = vadd.f32 0.0, %v965
      %v967 = vpop.f32.mrb[0].mxu0
      %v968 = vpop.f32.mrb[0].mxu0
      %v969 = vpop.f32.mrb[0].mxu0
      %970 = vdwg.mxu0
      %971 = vrot.lane.b32.xlu0 %v748, 112
      %v972 = vpop.permute.xlu0 %971
      %973 = vrot.lane.b32.xlu0 %v748, 80
      %v974 = vpop.permute.xlu0 %973
      %v976 = vsel %vm753, %v972, 0
      %v979 = vsel %vm753, %v974, 0
      %981 = vmatprep.subr.bf16.mxu0 0
      %982 = vmatpush1.bf16.xpose.msra.mxu0 %v979
      %983 = vmatprep.subr.bf16.mxu0 0
      %984 = vmatpush1.bf16.xpose.msra.mxu0 0
      %985 = vmatprep.subr.bf16.mxu0 0
      %986 = vmatpush1.bf16.xpose.msra.mxu0 0
      %987 = vmatprep.subr.bf16.mxu0 0
      %988 = vmatpush1.bf16.xpose.msra.mxu0 0
      %989 = vmatprep.subr.bf16.mxu0 0
      %990 = vmatpush1.bf16.xpose.msra.mxu0 0
      %991 = vmatprep.subr.bf16.mxu0 0
      %992 = vmatpush1.bf16.xpose.msra.mxu0 0
      %993 = vmatprep.subr.bf16.mxu0 0
      %994 = vmatpush1.bf16.xpose.msra.mxu0 0
      %995 = vmatprep.subr.bf16.mxu0 0
      %996 = vmatpush1.bf16.xpose.msra.mxu0 0
      %997 = vmatprep.subr.bf16.mxu0 0
      %998 = vmatpush1.bf16.xpose.msra.mxu0 0
      %999 = vmatprep.subr.bf16.mxu0 0
      %1000 = vmatpush1.bf16.xpose.msra.mxu0 0
      %1001 = vmatprep.subr.bf16.mxu0 0
      %1002 = vmatpush1.bf16.xpose.msra.mxu0 0
      %1003 = vmatprep.subr.bf16.mxu0 0
      %1004 = vmatpush1.bf16.xpose.msra.mxu0 0
      %1005 = vmatprep.subr.bf16.mxu0 0
      %1006 = vmatpush1.bf16.xpose.msra.mxu0 0
      %1007 = vmatprep.subr.bf16.mxu0 0
      %1008 = vmatpush1.bf16.xpose.msra.mxu0 0
      %1009 = vmatprep.subr.bf16.mxu0 0
      %1010 = vmatpush1.bf16.xpose.msra.mxu0 0
      %1011 = vmatprep.subr.bf16.mxu0 0
      %1012 = vmatpush1.bf16.xpose.msra.mxu0 0
      %1013 = vmatprep.mubr.bf16.mxu0 0
      %1014 = vmatmul.mubr.bf16.gmra.mrb[0].mxu0 %v976
      %v1015 = vpop.f32.mrb[0].mxu0
      %v1016 = vadd.f32 %v746, %v1015
      %v1017 = vpop.f32.mrb[0].mxu0
      %v1018 = vpop.f32.mrb[0].mxu0
      %v1019 = vpop.f32.mrb[0].mxu0
      %1020 = vdwg.mxu0
      %1021 = vrot.lane.b32.xlu0 %v749, 112
      %v1022 = vpop.permute.xlu0 %1021
      %1023 = vrot.lane.b32.xlu0 %v749, 80
      %v1024 = vpop.permute.xlu0 %1023
      %v1026 = vsel %vm753, %v1022, 0
      %v1029 = vsel %vm753, %v1024, 0
      %1031 = vmatprep.subr.bf16.mxu0 0
      %1032 = vmatpush1.bf16.xpose.msra.mxu0 %v1029
      %1033 = vmatprep.subr.bf16.mxu0 0
      %1034 = vmatpush1.bf16.xpose.msra.mxu0 0
      %1035 = vmatprep.subr.bf16.mxu0 0
      %1036 = vmatpush1.bf16.xpose.msra.mxu0 0
      %1037 = vmatprep.subr.bf16.mxu0 0
      %1038 = vmatpush1.bf16.xpose.msra.mxu0 0
      %1039 = vmatprep.subr.bf16.mxu0 0
      %1040 = vmatpush1.bf16.xpose.msra.mxu0 0
      %1041 = vmatprep.subr.bf16.mxu0 0
      %1042 = vmatpush1.bf16.xpose.msra.mxu0 0
      %1043 = vmatprep.subr.bf16.mxu0 0
      %1044 = vmatpush1.bf16.xpose.msra.mxu0 0
      %1045 = vmatprep.subr.bf16.mxu0 0
      %1046 = vmatpush1.bf16.xpose.msra.mxu0 0
      %1047 = vmatprep.subr.bf16.mxu0 0
      %1048 = vmatpush1.bf16.xpose.msra.mxu0 0
      %1049 = vmatprep.subr.bf16.mxu0 0
      %1050 = vmatpush1.bf16.xpose.msra.mxu0 0
      %1051 = vmatprep.subr.bf16.mxu0 0
      %1052 = vmatpush1.bf16.xpose.msra.mxu0 0
      %1053 = vmatprep.subr.bf16.mxu0 0
      %1054 = vmatpush1.bf16.xpose.msra.mxu0 0
      %1055 = vmatprep.subr.bf16.mxu0 0
      %1056 = vmatpush1.bf16.xpose.msra.mxu0 0
      %1057 = vmatprep.subr.bf16.mxu0 0
      %1058 = vmatpush1.bf16.xpose.msra.mxu0 0
      %1059 = vmatprep.subr.bf16.mxu0 0
      %1060 = vmatpush1.bf16.xpose.msra.mxu0 0
      %1061 = vmatprep.subr.bf16.mxu0 0
      %1062 = vmatpush1.bf16.xpose.msra.mxu0 0
      %1063 = vmatprep.mubr.bf16.mxu0 0
      %1064 = vmatmul.mubr.bf16.gmra.mrb[0].mxu0 %v1026
      %v1065 = vpop.f32.mrb[0].mxu0
      %v1066 = vadd.f32 %v747, %v1065
      %v1067 = vpop.f32.mrb[0].mxu0
      %v1068 = vpop.f32.mrb[0].mxu0
      %v1069 = vpop.f32.mrb[0].mxu0
      %1070 = vdwg.mxu0
      %v1071 = vsel %vm849, %v1016, -inf
      %1072 = vmax.xlane.f32.xlu0 %v1071
      %v1073 = vpop.xlane.xlu0 %1072
      %v1074 = vsel %vm849, %v1066, -inf
      %1075 = vmax.xlane.f32.xlu0 %v1074
      %v1076 = vpop.xlane.xlu0 %1075
      %v1077 = vsub.f32 %v1016, %v1073
      %v1078 = vsub.f32 %v1066, %v1076
      %v1079 = vmul.f32 %v1077, 1.442695
      %v1080 = vpow.pop %v1079
      %v1081 = vmul.f32 %v1078, 1.442695
      %v1082 = vpow.pop %v1081
      %v1083 = vsel %vm849, %v1080, 0.0
      %1084 = vadd.xlane.f32.xlu0 %v1083
      %v1085 = vpop.xlane.xlu0 %1084
      %v1086 = vsel %vm849, %v1082, 0.0
      %1087 = vadd.xlane.f32.xlu0 %v1086
      %v1088 = vpop.xlane.xlu0 %1087
      %v1089 = vrcp.pop %v1085
      %v1090 = vrcp.pop %v1088
      %v1091 = vmul.f32 %v1080, %v1089
      %v1092 = vmul.f32 %v1082, %v1090
      %v1093 = vpack.c.bf16 %v1091, %v1091
      %v1094 = vpack.c.bf16 %v1092, %v1092
      %1095 = vrot.lane.b32.xlu0 %v748, 48
      %v1096 = vpop.permute.xlu0 %1095
      %v1098 = vsel %vm849, %v1093, 0
      %v1101 = vsel %vm879, %v1096, 0
      %1103 = vmatprep.subr.bf16.mxu0 0
      %1104 = vmatpush1.bf16.msra.mxu0 %v1101
      %1105 = vmatprep.subr.bf16.mxu0 0
      %1106 = vmatpush1.bf16.msra.mxu0 0
      %1107 = vmatprep.subr.bf16.mxu0 0
      %1108 = vmatpush1.bf16.msra.mxu0 0
      %1109 = vmatprep.subr.bf16.mxu0 0
      %1110 = vmatpush1.bf16.msra.mxu0 0
      %1111 = vmatprep.subr.bf16.mxu0 0
      %1112 = vmatpush1.bf16.msra.mxu0 0
      %1113 = vmatprep.subr.bf16.mxu0 0
      %1114 = vmatpush1.bf16.msra.mxu0 0
      %1115 = vmatprep.subr.bf16.mxu0 0
      %1116 = vmatpush1.bf16.msra.mxu0 0
      %1117 = vmatprep.subr.bf16.mxu0 0
      %1118 = vmatpush1.bf16.msra.mxu0 0
      %1119 = vmatprep.subr.bf16.mxu0 0
      %1120 = vmatpush1.bf16.msra.mxu0 0
      %1121 = vmatprep.subr.bf16.mxu0 0
      %1122 = vmatpush1.bf16.msra.mxu0 0
      %1123 = vmatprep.subr.bf16.mxu0 0
      %1124 = vmatpush1.bf16.msra.mxu0 0
      %1125 = vmatprep.subr.bf16.mxu0 0
      %1126 = vmatpush1.bf16.msra.mxu0 0
      %1127 = vmatprep.subr.bf16.mxu0 0
      %1128 = vmatpush1.bf16.msra.mxu0 0
      %1129 = vmatprep.subr.bf16.mxu0 0
      %1130 = vmatpush1.bf16.msra.mxu0 0
      %1131 = vmatprep.subr.bf16.mxu0 0
      %1132 = vmatpush1.bf16.msra.mxu0 0
      %1133 = vmatprep.subr.bf16.mxu0 0
      %1134 = vmatpush1.bf16.msra.mxu0 0
      %1135 = vmatprep.mubr.bf16.mxu0 0
      %1136 = vmatmul.mubr.bf16.gmra.mrb[0].mxu0 %v1098
      %v1137 = vpop.f32.mrb[0].mxu0
      %v1138 = vadd.f32 0.0, %v1137
      %v1139 = vpop.f32.mrb[0].mxu0
      %v1140 = vpop.f32.mrb[0].mxu0
      %v1141 = vpop.f32.mrb[0].mxu0
      %1142 = vdwg.mxu0
      %1143 = vrot.lane.b32.xlu0 %v749, 48
      %v1144 = vpop.permute.xlu0 %1143
      %v1146 = vsel %vm849, %v1094, 0
      %v1149 = vsel %vm879, %v1144, 0
      %1151 = vmatprep.subr.bf16.mxu0 0
      %1152 = vmatpush1.bf16.msra.mxu0 %v1149
      %1153 = vmatprep.subr.bf16.mxu0 0
      %1154 = vmatpush1.bf16.msra.mxu0 0
      %1155 = vmatprep.subr.bf16.mxu0 0
      %1156 = vmatpush1.bf16.msra.mxu0 0
      %1157 = vmatprep.subr.bf16.mxu0 0
      %1158 = vmatpush1.bf16.msra.mxu0 0
      %1159 = vmatprep.subr.bf16.mxu0 0
      %1160 = vmatpush1.bf16.msra.mxu0 0
      %1161 = vmatprep.subr.bf16.mxu0 0
      %1162 = vmatpush1.bf16.msra.mxu0 0
      %1163 = vmatprep.subr.bf16.mxu0 0
      %1164 = vmatpush1.bf16.msra.mxu0 0
      %1165 = vmatprep.subr.bf16.mxu0 0
      %1166 = vmatpush1.bf16.msra.mxu0 0
      %1167 = vmatprep.subr.bf16.mxu0 0
      %1168 = vmatpush1.bf16.msra.mxu0 0
      %1169 = vmatprep.subr.bf16.mxu0 0
      %1170 = vmatpush1.bf16.msra.mxu0 0
      %1171 = vmatprep.subr.bf16.mxu0 0
      %1172 = vmatpush1.bf16.msra.mxu0 0
      %1173 = vmatprep.subr.bf16.mxu0 0
      %1174 = vmatpush1.bf16.msra.mxu0 0
      %1175 = vmatprep.subr.bf16.mxu0 0
      %1176 = vmatpush1.bf16.msra.mxu0 0
      %1177 = vmatprep.subr.bf16.mxu0 0
      %1178 = vmatpush1.bf16.msra.mxu0 0
      %1179 = vmatprep.subr.bf16.mxu0 0
      %1180 = vmatpush1.bf16.msra.mxu0 0
      %1181 = vmatprep.subr.bf16.mxu0 0
      %1182 = vmatpush1.bf16.msra.mxu0 0
      %1183 = vmatprep.mubr.bf16.mxu0 0
      %1184 = vmatmul.mubr.bf16.gmra.mrb[0].mxu0 %v1146
      %v1185 = vpop.f32.mrb[0].mxu0
      %v1186 = vadd.f32 0.0, %v1185
      %v1187 = vpop.f32.mrb[0].mxu0
      %v1188 = vpop.f32.mrb[0].mxu0
      %v1189 = vpop.f32.mrb[0].mxu0
      %1190 = vdwg.mxu0
      %1193 = vrot.lane.b32.xlu0 %v1138, 16
      %v1194 = vpop.permute.xlu0 %1193
      %1195 = vrot.lane.b32.xlu0 %v1186, 16
      %v1196 = vpop.permute.xlu0 %1195
      %v1199 = vsel %vm753, %v918, %v1194
      %v1200 = vsel %vm753, %v966, %v1196
      %v1201 = vpack.c.bf16 %v1200, %v1199
      %v1202 = vld [vmem:[%s593] sm:$0xf]
      %v1203 = vld [vmem:[%s593 + $0x4] sm:$0xf]
      %v1204 = vld [vmem:[%s593 + $0x8] sm:$0xf]
      %v1205 = vld [vmem:[%s593 + $0xc] sm:$0xf]
      %v1206 = vld [vmem:[%s596] sm:$0x1]
      %v1208 = vlaneseq
      %v1209 = vshrl.u32 %v1208, 7
      %v1210 = vsub.s32 0, %v1209
      %v1211 = vrot.slane %v1206, %v1210
      %v1217 = vunpack.c.l.b16 %v1202
      %v1218 = vunpack.c.l.b16 %v1203
      %v1219 = vunpack.c.l.b16 %v1204
      %v1220 = vunpack.c.l.b16 %v1205
      %v1221 = vpack.c.b16 %v1218, %v1217
      %v1222 = vpack.c.b16 %v1220, %v1219
      %v1226 = vsel %vm661, %v1201, 0
      %1228 = vmatprep.subr.bf16.mxu0 0
      %1229 = vmatpush1.bf16.msra.mxu0 %v1221
      %1230 = vmatprep.subr.bf16.mxu0 0
      %1231 = vmatpush1.bf16.msra.mxu0 %v1222
      %1232 = vmatprep.subr.bf16.mxu0 0
      %1233 = vmatpush1.bf16.msra.mxu0 0
      %1234 = vmatprep.subr.bf16.mxu0 0
      %1235 = vmatpush1.bf16.msra.mxu0 0
      %1236 = vmatprep.subr.bf16.mxu0 0
      %1237 = vmatpush1.bf16.msra.mxu0 0
      %1238 = vmatprep.subr.bf16.mxu0 0
      %1239 = vmatpush1.bf16.msra.mxu0 0
      %1240 = vmatprep.subr.bf16.mxu0 0
      %1241 = vmatpush1.bf16.msra.mxu0 0
      %1242 = vmatprep.subr.bf16.mxu0 0
      %1243 = vmatpush1.bf16.msra.mxu0 0
      %1244 = vmatprep.subr.bf16.mxu0 0
      %1245 = vmatpush1.bf16.msra.mxu0 0
      %1246 = vmatprep.subr.bf16.mxu0 0
      %1247 = vmatpush1.bf16.msra.mxu0 0
      %1248 = vmatprep.subr.bf16.mxu0 0
      %1249 = vmatpush1.bf16.msra.mxu0 0
      %1250 = vmatprep.subr.bf16.mxu0 0
      %1251 = vmatpush1.bf16.msra.mxu0 0
      %1252 = vmatprep.subr.bf16.mxu0 0
      %1253 = vmatpush1.bf16.msra.mxu0 0
      %1254 = vmatprep.subr.bf16.mxu0 0
      %1255 = vmatpush1.bf16.msra.mxu0 0
      %1256 = vmatprep.subr.bf16.mxu0 0
      %1257 = vmatpush1.bf16.msra.mxu0 0
      %1258 = vmatprep.subr.bf16.mxu0 0
      %1259 = vmatpush1.bf16.msra.mxu0 0
      %1260 = vmatprep.mubr.bf16.mxu0 0
      %1261 = vmatmul.mubr.bf16.gmra.mrb[0].mxu0 %v1226
      %v1262 = vpop.f32.mrb[0].mxu0
      %v1263 = vadd.f32 %v1211, %v1262
      %v1264 = vpop.f32.mrb[0].mxu0
      %v1265 = vpop.f32.mrb[0].mxu0
      %v1266 = vadd.f32 %v1211, %v1265
      %v1267 = vpop.f32.mrb[0].mxu0
      %1268 = vdwg.mxu0
      %v1269 = vadd.f32 %v635, %v1263
      %v1270 = vadd.f32 %v636, %v1266
      %v1271 = vsel %vm661, %v1269, 0.0
      %1272 = vadd.xlane.f32.xlu0 %v1271
      %v1273 = vpop.xlane.xlu0 %1272
      %v1274 = vsel %vm661, %v1270, 0.0
      %1275 = vadd.xlane.f32.xlu0 %v1274
      %v1276 = vpop.xlane.xlu0 %1275
      %v1277 = vrcp.pop 32.0
      %v1278 = vmul.f32 %v1273, %v1277
      %v1279 = vmul.f32 %v1276, %v1277
      %v1280 = vsub.f32 %v1269, %v1278
      %v1281 = vsub.f32 %v1270, %v1279
      %v1282 = vmul.f32 %v1280, %v1280
      %v1283 = vmul.f32 %v1281, %v1281
      %v1284 = vsel %vm661, %v1282, 0.0
      %1285 = vadd.xlane.f32.xlu0 %v1284
      %v1286 = vpop.xlane.xlu0 %1285
      %v1287 = vsel %vm661, %v1283, 0.0
      %1288 = vadd.xlane.f32.xlu0 %v1287
      %v1289 = vpop.xlane.xlu0 %1288
      %v1290 = vmul.f32 %v1286, %v1277
      %v1291 = vmul.f32 %v1289, %v1277
      %v1292 = vadd.f32 %v1290, 1e-05
      %v1293 = vadd.f32 %v1291, 1e-05
      %v1294 = vrsqrt.pop %v1292
      %v1295 = vrsqrt.pop %v1293
      %v1296 = vmul.f32 %v1280, %v1294
      %v1297 = vmul.f32 %v1281, %v1295
      %v1298 = vld [vmem:[%s599] sm:$0x1]
      %v1300 = vlaneseq
      %v1301 = vshrl.u32 %v1300, 7
      %v1302 = vsub.s32 0, %v1301
      %v1303 = vrot.slane %v1298, %v1302
      %v1305 = vmul.f32 %v1296, %v1303
      %v1306 = vmul.f32 %v1297, %v1303
      %v1307 = vld [vmem:[%s602] sm:$0x1]
      %v1309 = vlaneseq
      %v1310 = vshrl.u32 %v1309, 7
      %v1311 = vsub.s32 0, %v1310
      %v1312 = vrot.slane %v1307, %v1311
      %v1314 = vadd.f32 %v1305, %v1312
      %v1315 = vadd.f32 %v1306, %v1312
      %v1316 = vpack.c.bf16 %v1315, %v1314
      %v1317 = vld [vmem:[%s607] sm:$0xf]
      %v1318 = vld [vmem:[%s607 + $0x4] sm:$0xf]
      %v1319 = vld [vmem:[%s607 + $0x8] sm:$0xf]
      %v1320 = vld [vmem:[%s607 + $0xc] sm:$0xf]
      %v1321 = vld [vmem:[%s610] sm:$0x1]
      %v1323 = vlaneseq
      %v1324 = vshrl.u32 %v1323, 7
      %v1325 = vsub.s32 0, %v1324
      %v1326 = vrot.slane %v1321, %v1325
      %v1332 = vunpack.c.l.b16 %v1317
      %v1333 = vunpack.c.l.b16 %v1318
      %v1334 = vunpack.c.l.b16 %v1319
      %v1335 = vunpack.c.l.b16 %v1320
      %v1336 = vpack.c.b16 %v1333, %v1332
      %v1337 = vpack.c.b16 %v1335, %v1334
      %v1341 = vsel %vm661, %v1316, 0
      %1343 = vmatprep.subr.bf16.mxu0 0
      %1344 = vmatpush1.bf16.msra.mxu0 %v1336
      %1345 = vmatprep.subr.bf16.mxu0 0
      %1346 = vmatpush1.bf16.msra.mxu0 %v1337
      %1347 = vmatprep.subr.bf16.mxu0 0
      %1348 = vmatpush1.bf16.msra.mxu0 0
      %1349 = vmatprep.subr.bf16.mxu0 0
      %1350 = vmatpush1.bf16.msra.mxu0 0
      %1351 = vmatprep.subr.bf16.mxu0 0
      %1352 = vmatpush1.bf16.msra.mxu0 0
      %1353 = vmatprep.subr.bf16.mxu0 0
      %1354 = vmatpush1.bf16.msra.mxu0 0
      %1355 = vmatprep.subr.bf16.mxu0 0
      %1356 = vmatpush1.bf16.msra.mxu0 0
      %1357 = vmatprep.subr.bf16.mxu0 0
      %1358 = vmatpush1.bf16.msra.mxu0 0
      %1359 = vmatprep.subr.bf16.mxu0 0
      %1360 = vmatpush1.bf16.msra.mxu0 0
      %1361 = vmatprep.subr.bf16.mxu0 0
      %1362 = vmatpush1.bf16.msra.mxu0 0
      %1363 = vmatprep.subr.bf16.mxu0 0
      %1364 = vmatpush1.bf16.msra.mxu0 0
      %1365 = vmatprep.subr.bf16.mxu0 0
      %1366 = vmatpush1.bf16.msra.mxu0 0
      %1367 = vmatprep.subr.bf16.mxu0 0
      %1368 = vmatpush1.bf16.msra.mxu0 0
      %1369 = vmatprep.subr.bf16.mxu0 0
      %1370 = vmatpush1.bf16.msra.mxu0 0
      %1371 = vmatprep.subr.bf16.mxu0 0
      %1372 = vmatpush1.bf16.msra.mxu0 0
      %1373 = vmatprep.subr.bf16.mxu0 0
      %1374 = vmatpush1.bf16.msra.mxu0 0
      %1375 = vmatprep.mubr.bf16.mxu0 0
      %1376 = vmatmul.mubr.bf16.gmra.mrb[0].mxu0 %v1341
      %v1377 = vpop.f32.mrb[0].mxu0
      %v1378 = vadd.f32 %v1326, %v1377
      %v1379 = vpop.f32.mrb[0].mxu0
      %v1380 = vpop.f32.mrb[0].mxu0
      %v1381 = vadd.f32 %v1326, %v1380
      %v1382 = vpop.f32.mrb[0].mxu0
      %1383 = vdwg.mxu0
      %v1384 = vmax.f32 %v1378, 0.0
      %v1385 = vmax.f32 %v1381, 0.0
      %v1386 = vpack.c.bf16 %v1385, %v1384
      %v1387 = vld [vmem:[%s615] sm:$0xf]
      %v1388 = vld [vmem:[%s615 + $0x4] sm:$0xf]
      %v1389 = vld [vmem:[%s615 + $0x8] sm:$0xf]
      %v1390 = vld [vmem:[%s615 + $0xc] sm:$0xf]
      %v1391 = vld [vmem:[%s615 + $0x10] sm:$0xf]
      %v1392 = vld [vmem:[%s615 + $0x14] sm:$0xf]
      %v1393 = vld [vmem:[%s615 + $0x18] sm:$0xf]
      %v1394 = vld [vmem:[%s615 + $0x1c] sm:$0xf]
      %v1395 = vld [vmem:[%s618] sm:$0x1]
      %v1397 = vlaneseq
      %v1398 = vshrl.u32 %v1397, 7
      %v1399 = vsub.s32 0, %v1398
      %v1400 = vrot.slane %v1395, %v1399
      %v1410 = vunpack.c.l.b16 %v1387
      %v1411 = vunpack.c.l.b16 %v1388
      %v1412 = vunpack.c.l.b16 %v1389
      %v1413 = vunpack.c.l.b16 %v1390
      %v1414 = vunpack.c.l.b16 %v1391
      %v1415 = vunpack.c.l.b16 %v1392
      %v1416 = vunpack.c.l.b16 %v1393
      %v1417 = vunpack.c.l.b16 %v1394
      %v1418 = vpack.c.b16 %v1411, %v1410
      %v1419 = vpack.c.b16 %v1413, %v1412
      %v1420 = vpack.c.b16 %v1415, %v1414
      %v1421 = vpack.c.b16 %v1417, %v1416
      %vm1426 = vcmask 523264
      %v1428 = vsel %vm1426, %v1386, 0
      %1430 = vmatprep.subr.bf16.mxu0 0
      %1431 = vmatpush1.bf16.msra.mxu0 %v1418
      %1432 = vmatprep.subr.bf16.mxu0 0
      %1433 = vmatpush1.bf16.msra.mxu0 %v1419
      %1434 = vmatprep.subr.bf16.mxu0 0
      %1435 = vmatpush1.bf16.msra.mxu0 %v1420
      %1436 = vmatprep.subr.bf16.mxu0 0
      %1437 = vmatpush1.bf16.msra.mxu0 %v1421
      %1438 = vmatprep.subr.bf16.mxu0 0
      %1439 = vmatpush1.bf16.msra.mxu0 0
      %1440 = vmatprep.subr.bf16.mxu0 0
      %1441 = vmatpush1.bf16.msra.mxu0 0
      %1442 = vmatprep.subr.bf16.mxu0 0
      %1443 = vmatpush1.bf16.msra.mxu0 0
      %1444 = vmatprep.subr.bf16.mxu0 0
      %1445 = vmatpush1.bf16.msra.mxu0 0
      %1446 = vmatprep.subr.bf16.mxu0 0
      %1447 = vmatpush1.bf16.msra.mxu0 0
      %1448 = vmatprep.subr.bf16.mxu0 0
      %1449 = vmatpush1.bf16.msra.mxu0 0
      %1450 = vmatprep.subr.bf16.mxu0 0
      %1451 = vmatpush1.bf16.msra.mxu0 0
      %1452 = vmatprep.subr.bf16.mxu0 0
      %1453 = vmatpush1.bf16.msra.mxu0 0
      %1454 = vmatprep.subr.bf16.mxu0 0
      %1455 = vmatpush1.bf16.msra.mxu0 0
      %1456 = vmatprep.subr.bf16.mxu0 0
      %1457 = vmatpush1.bf16.msra.mxu0 0
      %1458 = vmatprep.subr.bf16.mxu0 0
      %1459 = vmatpush1.bf16.msra.mxu0 0
      %1460 = vmatprep.subr.bf16.mxu0 0
      %1461 = vmatpush1.bf16.msra.mxu0 0
      %1462 = vmatprep.mubr.bf16.mxu0 0
      %1463 = vmatmul.mubr.bf16.gmra.mrb[0].mxu0 %v1428
      %v1464 = vpop.f32.mrb[0].mxu0
      %v1465 = vadd.f32 %v1400, %v1464
      %v1466 = vpop.f32.mrb[0].mxu0
      %v1467 = vpop.f32.mrb[0].mxu0
      %v1468 = vadd.f32 %v1400, %v1467
      %v1469 = vpop.f32.mrb[0].mxu0
      %1470 = vdwg.mxu0
      %v1471 = vadd.f32 %v1314, %v1465
      %v1472 = vadd.f32 %v1315, %v1468
      %v1473 = vsel %vm661, %v1471, 0.0
      %1474 = vadd.xlane.f32.xlu0 %v1473
      %v1475 = vpop.xlane.xlu0 %1474
      %v1476 = vsel %vm661, %v1472, 0.0
      %1477 = vadd.xlane.f32.xlu0 %v1476
      %v1478 = vpop.xlane.xlu0 %1477
      %v1479 = vmul.f32 %v1475, %v1277
      %v1480 = vmul.f32 %v1478, %v1277
      %v1481 = vsub.f32 %v1471, %v1479
      %v1482 = vsub.f32 %v1472, %v1480
      %v1483 = vmul.f32 %v1481, %v1481
      %v1484 = vmul.f32 %v1482, %v1482
      %v1485 = vsel %vm661, %v1483, 0.0
      %1486 = vadd.xlane.f32.xlu0 %v1485
      %v1487 = vpop.xlane.xlu0 %1486
      %v1488 = vsel %vm661, %v1484, 0.0
      %1489 = vadd.xlane.f32.xlu0 %v1488
      %v1490 = vpop.xlane.xlu0 %1489
      %v1491 = vmul.f32 %v1487, %v1277
      %v1492 = vmul.f32 %v1490, %v1277
      %v1493 = vadd.f32 %v1491, 1e-05
      %v1494 = vadd.f32 %v1492, 1e-05
      %v1495 = vrsqrt.pop %v1493
      %v1496 = vrsqrt.pop %v1494
      %v1497 = vmul.f32 %v1481, %v1495
      %v1498 = vmul.f32 %v1482, %v1496
      %v1499 = vld [vmem:[%s621] sm:$0x1]
      %v1501 = vlaneseq
      %v1502 = vshrl.u32 %v1501, 7
      %v1503 = vsub.s32 0, %v1502
      %v1504 = vrot.slane %v1499, %v1503
      %v1506 = vmul.f32 %v1497, %v1504
      %v1507 = vmul.f32 %v1498, %v1504
      %v1508 = vld [vmem:[%s624] sm:$0x1]
      %v1510 = vlaneseq
      %v1511 = vshrl.u32 %v1510, 7
      %v1512 = vsub.s32 0, %v1511
      %v1513 = vrot.slane %v1508, %v1512
      %v1515 = vadd.f32 %v1506, %v1513
      %v1516 = vadd.f32 %v1507, %v1513
      %1517 = vst.msk [vmem:[#allocation2] sm:$0xff] %vm661, %v1515
      %1518 = vst.msk [vmem:[#allocation2 + $0x8] sm:$0xff] %vm661, %v1516
      %1519 = vst.msk [vmem:[%s14] sm:$0xff] %vm661, %v1515
      %1520 = vst.msk [vmem:[%s14 + $0x8] sm:$0xff] %vm661, %v1516
      // Predicated region
      $region81: #{gpt_forward.2} parent=75 // pred_check
        %p1521 = pneg %p392
      $region82: #{gpt_forward.2} parent=75 // pred_check_branch
        %1523 = sbr.rel (%p1521) target = $region84
      $region83: #{gpt_forward.2} parent=75 // pred_region
        _
      $region84: #{gpt_forward.2} parent=75 // pred_fallthru
        _
      // Predicated region
      $region85: #{gpt_forward.2} parent=75 // pred_check
        %p1524 = pneg %p392
      $region86: #{gpt_forward.2} parent=75 // pred_check_branch
        %1526 = sbr.rel (%p1524) target = $region88
      $region87: #{gpt_forward.2} parent=75 // pred_region
        _
      $region88: #{gpt_forward.2} parent=75 // pred_fallthru
        _
    $region76: #{gpt_forward.2} parent=5 // pred_fallthru
      _
    %p1527 = scmp.le.s32.totalorder 2, %s20
    // Predicated region
    $region89: #{gpt_forward.2} parent=5 // pred_check
      %p1528 = pneg %p1527
    $region90: #{gpt_forward.2} parent=5 // pred_check_branch
      %1530 = sbr.rel (%p1528) target = $region92
    $region91: #{gpt_forward.2} parent=5 // pred_region
      %s1531 = ssub.s32 %s20, 2
    $region92: #{gpt_forward.2} parent=5 // pred_fallthru
      _
  $region6: #{gpt_forward.2} parent=0 // loop_footer
    %s24 = sadd.s32 1, %s20
  $region7: #{gpt_forward.2} parent=0 // loop_footer_branch
    %19 = sbr.rel target = $region3
  $region8: #{gpt_forward.2} parent=0 // loop_exit
    _

</llo_original>
